<compile_context>
chip_gen: v6e
topology: v6e:2x2x1
jax: 0.10.0
libtpu: 0.0.40
codegen_flags: <defaults>
</compile_context>

<pallas_src>
import math
from functools import partial

import jax
import jax.numpy as jnp
from jax.experimental import pallas as pl
from jax.experimental.pallas import tpu as pltpu


def _detect_kernel(x_ref, w_ref, const_ref, raw_ref, dec_ref, *,
                   stride, nx, tp, compute_dtype):
    # x_ref: (C, TP) channels-first pixels of one batch element (NCHW slice)
    # w_ref: (NT, C) 1x1-conv weight
    # const_ref: (NT, 6) = [bias, A(=2*stride|1), 4*anchor, is_x, is_y, is_wh]
    # raw_ref / dec_ref: (NT, TP)
    bias = const_ref[:, 0:1]
    a_row = const_ref[:, 1:2]
    c4a = const_ref[:, 2:3]
    is_x = const_ref[:, 3:4]
    is_y = const_ref[:, 4:5]
    is_wh = const_ref[:, 5:6] > 0.5

    x = x_ref[...]
    if x.dtype != compute_dtype:            # cast only if needed (free VPU work)
        x = x.astype(compute_dtype)
    raw = jnp.dot(w_ref[...], x, preferred_element_type=jnp.float32) + bias
    s = jax.nn.sigmoid(raw)                 # EUP

    # Per-column pixel coords from iota (exact in f32 for P < 2^23 pixels).
    p = (pl.program_id(1) * tp
         + jax.lax.broadcasted_iota(jnp.int32, (1, tp), 1)).astype(jnp.float32)
    gy = jnp.floor((p + 0.5) * (1.0 / nx))
    gx = p - gy * nx
    gxs = gx * stride - 0.5 * stride        # (1, TP)
    gys = gy * stride - 0.5 * stride

    # xy: (2s - 0.5 + g)*stride == A*s + B ; wh: (2s)^2*anc == (4*anc)*s*s ; rest: s
    b_full = is_x * gxs + is_y * gys        # (NT, TP); zero on wh / score rows
    dec = jnp.where(is_wh, (c4a * s) * s, a_row * s + b_full)

    raw_ref[...] = raw.astype(raw_ref.dtype)
    dec_ref[...] = dec


_TP_CAP = 4096                       # lane cap (large-tile amortization on v6e)
_VMEM_BUDGET_BYTES = 12 * 1024 * 1024  # under v5e's 16 MiB default scoped VMEM


def _pick_pixel_tile(P, C, NT, in_itemsize, raw_itemsize):
    """Pick TP from a VMEM budget (double-buffered in/out blocks + weight)."""
    budget = max(_VMEM_BUDGET_BYTES - 2 * NT * C * 4 - (64 << 10), 1 << 20)
    per_lane = 2 * (in_itemsize * C + (4 + raw_itemsize) * NT)
    tp = min(_TP_CAP, budget // per_lane)
    if tp >= P:
        return P, 1                  # full-extent last dim is always legal
    tp = max(128, (tp // 128) * 128)
    return tp, pl.cdiv(P, tp)        # boundary block masked by Pallas


def _dimension_semantics(bs, n_tiles):
    kind = ""
    try:
        kind = jax.devices()[0].device_kind.lower()
    except Exception:
        pass
    if "v7" in kind or "tpu7" in kind:
        # v7x has 2 TensorCores per chip: shard the larger grid axis across them.
        if n_tiles >= bs:
            return (pltpu.PARALLEL, pltpu.CORE_PARALLEL)
        return (pltpu.CORE_PARALLEL, pltpu.PARALLEL)
    return ("parallel", "parallel")


def detect_layer_pallas(x_nchw, w, b, stride, anchors_l, na, no, *,
                        compute_dtype=None, raw_dtype=jnp.float32,
                        raw_torch_layout=True):
    """One detection level: fused 1x1 conv + bias + YOLO decode."""
    bs, C, ny, nx = x_nchw.shape
    NT = na * no
    P = ny * nx

    # NCHW -> (bs, C, P): free view, kept in the NATIVE dtype (no extra HBM pass).
    x3 = x_nchw.reshape(bs, C, P)
    cd = jnp.dtype(compute_dtype) if compute_dtype is not None else x3.dtype
    wt = w.reshape(NT, C).astype(cd)

    # Per-row decode constants hoisted out of the kernel into one (NT, 6) table.
    j = jnp.arange(NT)
    c_idx = j % no
    a_idx = j // no
    is_x = (c_idx == 0)
    is_y = (c_idx == 1)
    is_wh = (c_idx == 2) | (c_idx == 3)
    a_row = jnp.where(is_x | is_y, 2.0 * float(stride), 1.0)
    anc = anchors_l[a_idx, jnp.clip(c_idx - 2, 0, 1)]
    c4a = jnp.where(is_wh, 4.0 * anc, 0.0)
    const = jnp.stack([b.astype(jnp.float32), a_row, c4a,
                       is_x.astype(jnp.float32), is_y.astype(jnp.float32),
                       is_wh.astype(jnp.float32)], axis=1)            # (NT, 6)

    in_item = jnp.dtype(x3.dtype).itemsize
    raw_item = jnp.dtype(raw_dtype).itemsize
    TP, n_tiles = _pick_pixel_tile(P, C, NT, in_item, raw_item)

    kernel = partial(_detect_kernel, stride=float(stride), nx=nx, tp=TP,
                     compute_dtype=cd)

    cost = pl.CostEstimate(
        flops=2 * bs * P * C * NT + 10 * bs * P * NT,
        transcendentals=bs * P * NT,
        bytes_accessed=(bs * C * P * in_item + NT * C * wt.dtype.itemsize
                        + bs * NT * P * (4 + raw_item) + NT * 6 * 4))

    raw, dec = pl.pallas_call(
        kernel,
        out_shape=(jax.ShapeDtypeStruct((bs, NT, P), raw_dtype),
                   jax.ShapeDtypeStruct((bs, NT, P), jnp.float32)),
        grid=(bs, n_tiles),
        in_specs=[
            pl.BlockSpec((None, C, TP), lambda bi, pi: (bi, 0, pi)),   # NCHW direct
            pl.BlockSpec((NT, C), lambda bi, pi: (0, 0)),
            pl.BlockSpec((NT, 6), lambda bi, pi: (0, 0)),
        ],
        out_specs=(pl.BlockSpec((None, NT, TP), lambda bi, pi: (bi, 0, pi)),
                   pl.BlockSpec((None, NT, TP), lambda bi, pi: (bi, 0, pi))),
        compiler_params=pltpu.CompilerParams(
            dimension_semantics=_dimension_semantics(bs, n_tiles)),
        cost_estimate=cost,
    )(x3, wt, const)

    # z in PyTorch ordering: (bs, na*P, no). One transpose per level, fused with
    # the cross-level concat under jit.
    z = dec.reshape(bs, na, no, P).transpose(0, 1, 3, 2).reshape(bs, na * P, no)

    if raw_torch_layout:
        raw_out = raw.reshape(bs, na, no, ny, nx).transpose(0, 1, 3, 4, 2)
    else:
        # Free view; use when raw isn't consumed in PyTorch layout downstream.
        raw_out = raw.reshape(bs, na, no, ny, nx)
    return raw_out, z


def yolov7_head_forward(xs, weights, biases, anchors, *, stride, na, no,
                        compute_dtype, raw_dtype, raw_torch_layout):
    # Eval path (training=False, export=False): returns (cat(z, 1), [raw per level]).
    # TODO(synk): training/export branches (raw-only output) not exercised here.
    raws, zs = [], []
    for i, x in enumerate(xs):
        raw, z = detect_layer_pallas(
            x, weights[i], biases[i], stride[i], anchors[i], na, no,
            compute_dtype=compute_dtype, raw_dtype=raw_dtype,
            raw_torch_layout=raw_torch_layout)
        raws.append(raw)
        zs.append(z)
    return jnp.concatenate(zs, axis=1), raws


class Yolov7DetectPallas:
    """Yolov7Detect head; anchors are nested (w, h) pairs per layer (PyTorch spec)."""

    def __init__(self, num_classes, input_channel, stride, anchors, key,
                 compute_dtype=None, raw_dtype=jnp.float32):
        self.num_classes = num_classes
        self.num_outputs = num_classes + 5
        self.num_layers = len(anchors)
        self.num_anchors = len(anchors[0])          # (w, h) pairs per layer
        self.stride = tuple(float(s) for s in stride)
        self.compute_dtype = compute_dtype          # None => use activation dtype
        self.raw_dtype = raw_dtype                  # bf16 halves raw write traffic
        self.anchors = jnp.asarray(anchors, dtype=jnp.float32).reshape(
            self.num_layers, -1, 2)
        NT = self.num_outputs * self.num_anchors

        self.weights, self.biases = [], []
        keys = jax.random.split(key, len(input_channel))
        for k, c_in, s in zip(keys, input_channel, self.stride):
            w = 0.02 * jax.random.normal(k, (NT, c_in, 1, 1), dtype=jnp.float32)
            bb = jnp.zeros((self.num_anchors, self.num_outputs), dtype=jnp.float32)
            bb = bb.at[:, 4].add(math.log(8.0 / (640.0 / s) ** 2))
            bb = bb.at[:, 5:].add(math.log(0.6 / (self.num_classes - 0.99)))
            self.weights.append(w)
            self.biases.append(bb.reshape(-1))

        # Whole head under one jit so per-level transposes fuse with the concat.
        self._forward = jax.jit(
            yolov7_head_forward,
            static_argnames=("stride", "na", "no", "compute_dtype", "raw_dtype",
                             "raw_torch_layout"))

    def __call__(self, xs, raw_torch_layout=True):
        return self._forward(
            list(xs), tuple(self.weights), tuple(self.biases), self.anchors,
            stride=self.stride, na=self.num_anchors, no=self.num_outputs,
            compute_dtype=self.compute_dtype, raw_dtype=self.raw_dtype,
            raw_torch_layout=raw_torch_layout)


def _reference_layer(x_nchw, w, b, stride, anchors_l, na, no):
    """Pure-JAX reference mirroring the PyTorch forward (eval mode)."""
    bs, C, ny, nx = x_nchw.shape
    out = jnp.einsum("bchw,oc->bohw", x_nchw, w.reshape(na * no, C),
                     precision=jax.lax.Precision.HIGHEST) \
        + b[None, :, None, None]
    raw = out.reshape(bs, na, no, ny, nx).transpose(0, 1, 3, 4, 2)
    y = jax.nn.sigmoid(raw)
    yv, xv = jnp.meshgrid(jnp.arange(ny, dtype=jnp.float32),
                          jnp.arange(nx, dtype=jnp.float32), indexing="ij")
    grid = jnp.stack([xv, yv], axis=-1).reshape(1, 1, ny, nx, 2)
    xy = (y[..., 0:2] * 2.0 - 0.5 + grid) * stride
    wh = (y[..., 2:4] * 2.0) ** 2 * anchors_l[None, :, None, None, :]
    y = jnp.concatenate([xy, wh, y[..., 4:]], axis=-1)
    return raw, y.reshape(bs, -1, no)


if __name__ == "__main__":
    num_classes = 3                              # num_outputs = 8, NT = 24
    input_channel = [16, 32, 64]
    stride = [8.0, 16.0, 32.0]
    anchors = [[[12, 16], [19, 36], [40, 28]],
               [[36, 75], [76, 55], [72, 146]],
               [[142, 110], [192, 243], [459, 401]]]   # 3 layers x 3 anchors

    key = jax.random.PRNGKey(0)
    kp, k0, k1, k2 = jax.random.split(key, 4)

    # NCHW inputs for the three pyramid levels (base image 64x64).
    xs = [jax.random.normal(k0, (2, 16, 8, 8), dtype=jnp.float32),
          jax.random.normal(k1, (2, 32, 4, 4), dtype=jnp.float32),
          jax.random.normal(k2, (2, 64, 2, 2), dtype=jnp.float32)]

    model = Yolov7DetectPallas(num_classes, input_channel, stride, anchors, kp)
    z_cat, raws = model(xs)
    z_cat = jax.block_until_ready(z_cat)
    raws = [jax.block_until_ready(r) for r in raws]

    # Pure-JAX reference (eval-mode PyTorch forward).
    ref_z, ref_raws = [], []
    for i in range(3):
        r_raw, r_z = _reference_layer(xs[i], model.weights[i], model.biases[i],
                                      stride[i], model.anchors[i],
                                      model.num_anchors, model.num_outputs)
        ref_raws.append(r_raw)
        ref_z.append(r_z)
    ref_z_cat = jnp.concatenate(ref_z, axis=1)

    assert z_cat.shape == (2, 3 * (8 * 8 + 4 * 4 + 2 * 2), num_classes + 5)
    for r, rr in zip(raws, ref_raws):
        assert r.shape == rr.shape
        assert jnp.allclose(r, rr, rtol=1e-2, atol=1e-2)
    assert jnp.allclose(z_cat, ref_z_cat, rtol=1e-2, atol=1e-1)

    # Native-bf16 activation path: halves input DMA, bf16 MXU operands,
    # decode math stays f32 (no wrapper-side cast, no extra HBM pass).
    xs_bf16 = [x.astype(jnp.bfloat16) for x in xs]
    z_bf16, _ = model(xs_bf16)
    z_bf16 = jax.block_until_ready(z_bf16)
    assert jnp.allclose(z_bf16, ref_z_cat, rtol=5e-2, atol=1.0)

    print("KERNEL_OK")
</pallas_src>

<mosaic_0001>
module attributes {stable_mosaic.version = 11 : i64} {
  func.func @_detect_kernel(%arg0: i32, %arg1: i32, %arg2: memref<1x64x4xf32, #tpu.memory_space<vmem>>, %arg3: memref<24x64xf32, #tpu.memory_space<vmem>>, %arg4: memref<24x6xf32, #tpu.memory_space<vmem>>, %arg5: memref<1x24x4xf32, #tpu.memory_space<vmem>>, %arg6: memref<1x24x4xf32, #tpu.memory_space<vmem>>) attributes {dimension_semantics = [#tpu.dimension_semantics<parallel>, #tpu.dimension_semantics<parallel>], iteration_bounds = array<i64: 2, 1>, scalar_prefetch = 0 : i64, scratch_operands = 0 : i64, tpu.core_type = #tpu.core_type<tc>, window_params = [{transform_indices = @transform_0, window_bounds = array<i64: 1, 64, 4>}, {pipeline_mode = #tpu.pipeline_mode<synchronous>, transform_indices = @transform_1, window_bounds = array<i64: 24, 64>}, {pipeline_mode = #tpu.pipeline_mode<synchronous>, transform_indices = @transform_2, window_bounds = array<i64: 24, 6>}, {transform_indices = @transform_3, window_bounds = array<i64: 1, 24, 4>}, {transform_indices = @transform_4, window_bounds = array<i64: 1, 24, 4>}]} {
    %c0 = arith.constant 0 : index
    %c0_0 = arith.constant 0 : index
    %0 = vector.load %arg4[%c0, %c0_0] : memref<24x6xf32, #tpu.memory_space<vmem>>, vector<24x1xf32>
    %c0_1 = arith.constant 0 : index
    %c1 = arith.constant 1 : index
    %1 = vector.load %arg4[%c0_1, %c1] : memref<24x6xf32, #tpu.memory_space<vmem>>, vector<24x1xf32>
    %c0_2 = arith.constant 0 : index
    %c2 = arith.constant 2 : index
    %2 = vector.load %arg4[%c0_2, %c2] : memref<24x6xf32, #tpu.memory_space<vmem>>, vector<24x1xf32>
    %c0_3 = arith.constant 0 : index
    %c3 = arith.constant 3 : index
    %3 = vector.load %arg4[%c0_3, %c3] : memref<24x6xf32, #tpu.memory_space<vmem>>, vector<24x1xf32>
    %c0_4 = arith.constant 0 : index
    %c4 = arith.constant 4 : index
    %4 = vector.load %arg4[%c0_4, %c4] : memref<24x6xf32, #tpu.memory_space<vmem>>, vector<24x1xf32>
    %c0_5 = arith.constant 0 : index
    %c5 = arith.constant 5 : index
    %5 = vector.load %arg4[%c0_5, %c5] : memref<24x6xf32, #tpu.memory_space<vmem>>, vector<24x1xf32>
    %cst = arith.constant 5.000000e-01 : f32
    %6 = vector.broadcast %cst : f32 to vector<24x1xf32>
    %7 = arith.cmpf ogt, %5, %6 : vector<24x1xf32>
    %c0_6 = arith.constant 0 : index
    %c0_7 = arith.constant 0 : index
    %c0_8 = arith.constant 0 : index
    %8 = vector.load %arg2[%c0_6, %c0_7, %c0_8] : memref<1x64x4xf32, #tpu.memory_space<vmem>>, vector<1x64x4xf32>
    %9 = vector.shape_cast %8 : vector<1x64x4xf32> to vector<64x4xf32>
    %c0_9 = arith.constant 0 : index
    %c0_10 = arith.constant 0 : index
    %10 = vector.load %arg3[%c0_9, %c0_10] : memref<24x64xf32, #tpu.memory_space<vmem>>, vector<24x64xf32>
    %cst_11 = arith.constant dense<0.000000e+00> : vector<24x4xf32>
    %11 = tpu.matmul %10, %9, %cst_11 {dimension_numbers = #tpu.dot_dimension_numbers<[1], [0], [0], [1], [0, 0, 1, 1], [], []>} : vector<24x64xf32>, vector<64x4xf32>, vector<24x4xf32> -> vector<24x4xf32>
    %12 = vector.broadcast %0 : vector<24x1xf32> to vector<24x4xf32>
    %13 = arith.addf %11, %12 : vector<24x4xf32>
    %14 = arith.negf %13 : vector<24x4xf32>
    %15 = math.exp %14 : vector<24x4xf32>
    %cst_12 = arith.constant 1.000000e+00 : f32
    %16 = vector.broadcast %cst_12 : f32 to vector<24x4xf32>
    %17 = arith.addf %16, %15 : vector<24x4xf32>
    %18 = arith.divf %16, %17 : vector<24x4xf32>
    %c4_i32 = arith.constant 4 : i32
    %19 = arith.muli %arg1, %c4_i32 : i32
    %20 = tpu.iota {dimensions = array<i32: 1>} : vector<1x4xi32>
    %21 = vector.broadcast %19 : i32 to vector<1x4xi32>
    %22 = arith.addi %21, %20 : vector<1x4xi32>
    %23 = arith.sitofp %22 : vector<1x4xi32> to vector<1x4xf32>
    %cst_13 = arith.constant 5.000000e-01 : f32
    %24 = vector.broadcast %cst_13 : f32 to vector<1x4xf32>
    %25 = arith.addf %23, %24 : vector<1x4xf32>
    %cst_14 = arith.constant 5.000000e-01 : f32
    %26 = vector.broadcast %cst_14 : f32 to vector<1x4xf32>
    %27 = arith.mulf %25, %26 : vector<1x4xf32>
    %28 = math.floor %27 : vector<1x4xf32>
    %cst_15 = arith.constant 2.000000e+00 : f32
    %29 = vector.broadcast %cst_15 : f32 to vector<1x4xf32>
    %30 = arith.mulf %28, %29 : vector<1x4xf32>
    %31 = arith.subf %23, %30 : vector<1x4xf32>
    %cst_16 = arith.constant 3.200000e+01 : f32
    %32 = vector.broadcast %cst_16 : f32 to vector<1x4xf32>
    %33 = arith.mulf %31, %32 : vector<1x4xf32>
    %cst_17 = arith.constant 1.600000e+01 : f32
    %34 = vector.broadcast %cst_17 : f32 to vector<1x4xf32>
    %35 = arith.subf %33, %34 : vector<1x4xf32>
    %cst_18 = arith.constant 3.200000e+01 : f32
    %36 = vector.broadcast %cst_18 : f32 to vector<1x4xf32>
    %37 = arith.mulf %28, %36 : vector<1x4xf32>
    %cst_19 = arith.constant 1.600000e+01 : f32
    %38 = vector.broadcast %cst_19 : f32 to vector<1x4xf32>
    %39 = arith.subf %37, %38 : vector<1x4xf32>
    %40 = vector.broadcast %3 : vector<24x1xf32> to vector<24x4xf32>
    %41 = vector.broadcast %35 : vector<1x4xf32> to vector<24x4xf32>
    %42 = arith.mulf %40, %41 : vector<24x4xf32>
    %43 = vector.broadcast %4 : vector<24x1xf32> to vector<24x4xf32>
    %44 = vector.broadcast %39 : vector<1x4xf32> to vector<24x4xf32>
    %45 = arith.mulf %43, %44 : vector<24x4xf32>
    %46 = arith.addf %42, %45 : vector<24x4xf32>
    %47 = vector.broadcast %2 : vector<24x1xf32> to vector<24x4xf32>
    %48 = arith.mulf %47, %18 : vector<24x4xf32>
    %49 = arith.mulf %48, %18 : vector<24x4xf32>
    %50 = vector.broadcast %1 : vector<24x1xf32> to vector<24x4xf32>
    %51 = arith.mulf %50, %18 : vector<24x4xf32>
    %52 = arith.addf %51, %46 : vector<24x4xf32>
    %53 = vector.shape_cast %7 : vector<24x1xi1> to vector<24x1xi1>
    %54 = vector.broadcast %53 : vector<24x1xi1> to vector<24x4xi1>
    %55 = arith.select %54, %49, %52 : vector<24x4xi1>, vector<24x4xf32>
    %c0_20 = arith.constant 0 : index
    %c0_21 = arith.constant 0 : index
    %c0_22 = arith.constant 0 : index
    %56 = vector.load %arg5[%c0_20, %c0_21, %c0_22] : memref<1x24x4xf32, #tpu.memory_space<vmem>>, vector<1x24x4xf32>
    %57 = vector.shape_cast %56 : vector<1x24x4xf32> to vector<24x4xf32>
    %58 = vector.shape_cast %13 : vector<24x4xf32> to vector<1x24x4xf32>
    tpu.vector_store %arg5[%c0_20, %c0_21, %c0_22], %58 {strides = array<i32>} : memref<1x24x4xf32, #tpu.memory_space<vmem>>, vector<1x24x4xf32>,
    %c0_23 = arith.constant 0 : index
    %c0_24 = arith.constant 0 : index
    %c0_25 = arith.constant 0 : index
    %59 = vector.load %arg6[%c0_23, %c0_24, %c0_25] : memref<1x24x4xf32, #tpu.memory_space<vmem>>, vector<1x24x4xf32>
    %60 = vector.shape_cast %59 : vector<1x24x4xf32> to vector<24x4xf32>
    %61 = vector.shape_cast %55 : vector<24x4xf32> to vector<1x24x4xf32>
    tpu.vector_store %arg6[%c0_23, %c0_24, %c0_25], %61 {strides = array<i32>} : memref<1x24x4xf32, #tpu.memory_space<vmem>>, vector<1x24x4xf32>,
    return
  }
  func.func @transform_0(%arg0: i32, %arg1: i32) -> (i32, i32, i32) {
    %c0_i32 = arith.constant 0 : i32
    %c0_i32_0 = arith.constant 0 : i32
    return %arg0, %c0_i32, %arg1 : i32, i32, i32
  }
  func.func @transform_1(%arg0: i32, %arg1: i32) -> (i32, i32) {
    %c0_i32 = arith.constant 0 : i32
    %c0_i32_0 = arith.constant 0 : i32
    %c0_i32_1 = arith.constant 0 : i32
    return %c0_i32, %c0_i32_0 : i32, i32
  }
  func.func @transform_2(%arg0: i32, %arg1: i32) -> (i32, i32) {
    %c0_i32 = arith.constant 0 : i32
    %c0_i32_0 = arith.constant 0 : i32
    %c0_i32_1 = arith.constant 0 : i32
    return %c0_i32, %c0_i32_0 : i32, i32
  }
  func.func @transform_3(%arg0: i32, %arg1: i32) -> (i32, i32, i32) {
    %c0_i32 = arith.constant 0 : i32
    %c0_i32_0 = arith.constant 0 : i32
    return %arg0, %c0_i32, %arg1 : i32, i32, i32
  }
  func.func @transform_4(%arg0: i32, %arg1: i32) -> (i32, i32, i32) {
    %c0_i32 = arith.constant 0 : i32
    %c0_i32_0 = arith.constant 0 : i32
    return %arg0, %c0_i32, %arg1 : i32, i32, i32
  }
}

module attributes {stable_mosaic.version = 11 : i64} {
  func.func @_detect_kernel(%arg0: i32, %arg1: i32, %arg2: memref<1x16x64xf32, #tpu.memory_space<vmem>>, %arg3: memref<24x16xf32, #tpu.memory_space<vmem>>, %arg4: memref<24x6xf32, #tpu.memory_space<vmem>>, %arg5: memref<1x24x64xf32, #tpu.memory_space<vmem>>, %arg6: memref<1x24x64xf32, #tpu.memory_space<vmem>>) attributes {dimension_semantics = [#tpu.dimension_semantics<parallel>, #tpu.dimension_semantics<parallel>], iteration_bounds = array<i64: 2, 1>, scalar_prefetch = 0 : i64, scratch_operands = 0 : i64, tpu.core_type = #tpu.core_type<tc>, window_params = [{transform_indices = @transform_0, window_bounds = array<i64: 1, 16, 64>}, {pipeline_mode = #tpu.pipeline_mode<synchronous>, transform_indices = @transform_1, window_bounds = array<i64: 24, 16>}, {pipeline_mode = #tpu.pipeline_mode<synchronous>, transform_indices = @transform_2, window_bounds = array<i64: 24, 6>}, {transform_indices = @transform_3, window_bounds = array<i64: 1, 24, 64>}, {transform_indices = @transform_4, window_bounds = array<i64: 1, 24, 64>}]} {
    %c0 = arith.constant 0 : index
    %c0_0 = arith.constant 0 : index
    %0 = vector.load %arg4[%c0, %c0_0] : memref<24x6xf32, #tpu.memory_space<vmem>>, vector<24x1xf32>
    %c0_1 = arith.constant 0 : index
    %c1 = arith.constant 1 : index
    %1 = vector.load %arg4[%c0_1, %c1] : memref<24x6xf32, #tpu.memory_space<vmem>>, vector<24x1xf32>
    %c0_2 = arith.constant 0 : index
    %c2 = arith.constant 2 : index
    %2 = vector.load %arg4[%c0_2, %c2] : memref<24x6xf32, #tpu.memory_space<vmem>>, vector<24x1xf32>
    %c0_3 = arith.constant 0 : index
    %c3 = arith.constant 3 : index
    %3 = vector.load %arg4[%c0_3, %c3] : memref<24x6xf32, #tpu.memory_space<vmem>>, vector<24x1xf32>
    %c0_4 = arith.constant 0 : index
    %c4 = arith.constant 4 : index
    %4 = vector.load %arg4[%c0_4, %c4] : memref<24x6xf32, #tpu.memory_space<vmem>>, vector<24x1xf32>
    %c0_5 = arith.constant 0 : index
    %c5 = arith.constant 5 : index
    %5 = vector.load %arg4[%c0_5, %c5] : memref<24x6xf32, #tpu.memory_space<vmem>>, vector<24x1xf32>
    %cst = arith.constant 5.000000e-01 : f32
    %6 = vector.broadcast %cst : f32 to vector<24x1xf32>
    %7 = arith.cmpf ogt, %5, %6 : vector<24x1xf32>
    %c0_6 = arith.constant 0 : index
    %c0_7 = arith.constant 0 : index
    %c0_8 = arith.constant 0 : index
    %8 = vector.load %arg2[%c0_6, %c0_7, %c0_8] : memref<1x16x64xf32, #tpu.memory_space<vmem>>, vector<1x16x64xf32>
    %9 = vector.shape_cast %8 : vector<1x16x64xf32> to vector<16x64xf32>
    %c0_9 = arith.constant 0 : index
    %c0_10 = arith.constant 0 : index
    %10 = vector.load %arg3[%c0_9, %c0_10] : memref<24x16xf32, #tpu.memory_space<vmem>>, vector<24x16xf32>
    %cst_11 = arith.constant dense<0.000000e+00> : vector<24x64xf32>
    %11 = tpu.matmul %10, %9, %cst_11 {dimension_numbers = #tpu.dot_dimension_numbers<[1], [0], [0], [1], [0, 0, 1, 1], [], []>} : vector<24x16xf32>, vector<16x64xf32>, vector<24x64xf32> -> vector<24x64xf32>
    %12 = vector.broadcast %0 : vector<24x1xf32> to vector<24x64xf32>
    %13 = arith.addf %11, %12 : vector<24x64xf32>
    %14 = arith.negf %13 : vector<24x64xf32>
    %15 = math.exp %14 : vector<24x64xf32>
    %cst_12 = arith.constant 1.000000e+00 : f32
    %16 = vector.broadcast %cst_12 : f32 to vector<24x64xf32>
    %17 = arith.addf %16, %15 : vector<24x64xf32>
    %18 = arith.divf %16, %17 : vector<24x64xf32>
    %c64_i32 = arith.constant 64 : i32
    %19 = arith.muli %arg1, %c64_i32 : i32
    %20 = tpu.iota {dimensions = array<i32: 1>} : vector<1x64xi32>
    %21 = vector.broadcast %19 : i32 to vector<1x64xi32>
    %22 = arith.addi %21, %20 : vector<1x64xi32>
    %23 = arith.sitofp %22 : vector<1x64xi32> to vector<1x64xf32>
    %cst_13 = arith.constant 5.000000e-01 : f32
    %24 = vector.broadcast %cst_13 : f32 to vector<1x64xf32>
    %25 = arith.addf %23, %24 : vector<1x64xf32>
    %cst_14 = arith.constant 1.250000e-01 : f32
    %26 = vector.broadcast %cst_14 : f32 to vector<1x64xf32>
    %27 = arith.mulf %25, %26 : vector<1x64xf32>
    %28 = math.floor %27 : vector<1x64xf32>
    %cst_15 = arith.constant 8.000000e+00 : f32
    %29 = vector.broadcast %cst_15 : f32 to vector<1x64xf32>
    %30 = arith.mulf %28, %29 : vector<1x64xf32>
    %31 = arith.subf %23, %30 : vector<1x64xf32>
    %cst_16 = arith.constant 8.000000e+00 : f32
    %32 = vector.broadcast %cst_16 : f32 to vector<1x64xf32>
    %33 = arith.mulf %31, %32 : vector<1x64xf32>
    %cst_17 = arith.constant 4.000000e+00 : f32
    %34 = vector.broadcast %cst_17 : f32 to vector<1x64xf32>
    %35 = arith.subf %33, %34 : vector<1x64xf32>
    %cst_18 = arith.constant 8.000000e+00 : f32
    %36 = vector.broadcast %cst_18 : f32 to vector<1x64xf32>
    %37 = arith.mulf %28, %36 : vector<1x64xf32>
    %cst_19 = arith.constant 4.000000e+00 : f32
    %38 = vector.broadcast %cst_19 : f32 to vector<1x64xf32>
    %39 = arith.subf %37, %38 : vector<1x64xf32>
    %40 = vector.broadcast %3 : vector<24x1xf32> to vector<24x64xf32>
    %41 = vector.broadcast %35 : vector<1x64xf32> to vector<24x64xf32>
    %42 = arith.mulf %40, %41 : vector<24x64xf32>
    %43 = vector.broadcast %4 : vector<24x1xf32> to vector<24x64xf32>
    %44 = vector.broadcast %39 : vector<1x64xf32> to vector<24x64xf32>
    %45 = arith.mulf %43, %44 : vector<24x64xf32>
    %46 = arith.addf %42, %45 : vector<24x64xf32>
    %47 = vector.broadcast %2 : vector<24x1xf32> to vector<24x64xf32>
    %48 = arith.mulf %47, %18 : vector<24x64xf32>
    %49 = arith.mulf %48, %18 : vector<24x64xf32>
    %50 = vector.broadcast %1 : vector<24x1xf32> to vector<24x64xf32>
    %51 = arith.mulf %50, %18 : vector<24x64xf32>
    %52 = arith.addf %51, %46 : vector<24x64xf32>
    %53 = vector.shape_cast %7 : vector<24x1xi1> to vector<24x1xi1>
    %54 = vector.broadcast %53 : vector<24x1xi1> to vector<24x64xi1>
    %55 = arith.select %54, %49, %52 : vector<24x64xi1>, vector<24x64xf32>
    %c0_20 = arith.constant 0 : index
    %c0_21 = arith.constant 0 : index
    %c0_22 = arith.constant 0 : index
    %56 = vector.load %arg5[%c0_20, %c0_21, %c0_22] : memref<1x24x64xf32, #tpu.memory_space<vmem>>, vector<1x24x64xf32>
    %57 = vector.shape_cast %56 : vector<1x24x64xf32> to vector<24x64xf32>
    %58 = vector.shape_cast %13 : vector<24x64xf32> to vector<1x24x64xf32>
    tpu.vector_store %arg5[%c0_20, %c0_21, %c0_22], %58 {strides = array<i32>} : memref<1x24x64xf32, #tpu.memory_space<vmem>>, vector<1x24x64xf32>,
    %c0_23 = arith.constant 0 : index
    %c0_24 = arith.constant 0 : index
    %c0_25 = arith.constant 0 : index
    %59 = vector.load %arg6[%c0_23, %c0_24, %c0_25] : memref<1x24x64xf32, #tpu.memory_space<vmem>>, vector<1x24x64xf32>
    %60 = vector.shape_cast %59 : vector<1x24x64xf32> to vector<24x64xf32>
    %61 = vector.shape_cast %55 : vector<24x64xf32> to vector<1x24x64xf32>
    tpu.vector_store %arg6[%c0_23, %c0_24, %c0_25], %61 {strides = array<i32>} : memref<1x24x64xf32, #tpu.memory_space<vmem>>, vector<1x24x64xf32>,
    return
  }
  func.func @transform_0(%arg0: i32, %arg1: i32) -> (i32, i32, i32) {
    %c0_i32 = arith.constant 0 : i32
    %c0_i32_0 = arith.constant 0 : i32
    return %arg0, %c0_i32, %arg1 : i32, i32, i32
  }
  func.func @transform_1(%arg0: i32, %arg1: i32) -> (i32, i32) {
    %c0_i32 = arith.constant 0 : i32
    %c0_i32_0 = arith.constant 0 : i32
    %c0_i32_1 = arith.constant 0 : i32
    return %c0_i32, %c0_i32_0 : i32, i32
  }
  func.func @transform_2(%arg0: i32, %arg1: i32) -> (i32, i32) {
    %c0_i32 = arith.constant 0 : i32
    %c0_i32_0 = arith.constant 0 : i32
    %c0_i32_1 = arith.constant 0 : i32
    return %c0_i32, %c0_i32_0 : i32, i32
  }
  func.func @transform_3(%arg0: i32, %arg1: i32) -> (i32, i32, i32) {
    %c0_i32 = arith.constant 0 : i32
    %c0_i32_0 = arith.constant 0 : i32
    return %arg0, %c0_i32, %arg1 : i32, i32, i32
  }
  func.func @transform_4(%arg0: i32, %arg1: i32) -> (i32, i32, i32) {
    %c0_i32 = arith.constant 0 : i32
    %c0_i32_0 = arith.constant 0 : i32
    return %arg0, %c0_i32, %arg1 : i32, i32, i32
  }
}

module attributes {stable_mosaic.version = 11 : i64} {
  func.func @_detect_kernel(%arg0: i32, %arg1: i32, %arg2: memref<1x32x16xf32, #tpu.memory_space<vmem>>, %arg3: memref<24x32xf32, #tpu.memory_space<vmem>>, %arg4: memref<24x6xf32, #tpu.memory_space<vmem>>, %arg5: memref<1x24x16xf32, #tpu.memory_space<vmem>>, %arg6: memref<1x24x16xf32, #tpu.memory_space<vmem>>) attributes {dimension_semantics = [#tpu.dimension_semantics<parallel>, #tpu.dimension_semantics<parallel>], iteration_bounds = array<i64: 2, 1>, scalar_prefetch = 0 : i64, scratch_operands = 0 : i64, tpu.core_type = #tpu.core_type<tc>, window_params = [{transform_indices = @transform_0, window_bounds = array<i64: 1, 32, 16>}, {pipeline_mode = #tpu.pipeline_mode<synchronous>, transform_indices = @transform_1, window_bounds = array<i64: 24, 32>}, {pipeline_mode = #tpu.pipeline_mode<synchronous>, transform_indices = @transform_2, window_bounds = array<i64: 24, 6>}, {transform_indices = @transform_3, window_bounds = array<i64: 1, 24, 16>}, {transform_indices = @transform_4, window_bounds = array<i64: 1, 24, 16>}]} {
    %c0 = arith.constant 0 : index
    %c0_0 = arith.constant 0 : index
    %0 = vector.load %arg4[%c0, %c0_0] : memref<24x6xf32, #tpu.memory_space<vmem>>, vector<24x1xf32>
    %c0_1 = arith.constant 0 : index
    %c1 = arith.constant 1 : index
    %1 = vector.load %arg4[%c0_1, %c1] : memref<24x6xf32, #tpu.memory_space<vmem>>, vector<24x1xf32>
    %c0_2 = arith.constant 0 : index
    %c2 = arith.constant 2 : index
    %2 = vector.load %arg4[%c0_2, %c2] : memref<24x6xf32, #tpu.memory_space<vmem>>, vector<24x1xf32>
    %c0_3 = arith.constant 0 : index
    %c3 = arith.constant 3 : index
    %3 = vector.load %arg4[%c0_3, %c3] : memref<24x6xf32, #tpu.memory_space<vmem>>, vector<24x1xf32>
    %c0_4 = arith.constant 0 : index
    %c4 = arith.constant 4 : index
    %4 = vector.load %arg4[%c0_4, %c4] : memref<24x6xf32, #tpu.memory_space<vmem>>, vector<24x1xf32>
    %c0_5 = arith.constant 0 : index
    %c5 = arith.constant 5 : index
    %5 = vector.load %arg4[%c0_5, %c5] : memref<24x6xf32, #tpu.memory_space<vmem>>, vector<24x1xf32>
    %cst = arith.constant 5.000000e-01 : f32
    %6 = vector.broadcast %cst : f32 to vector<24x1xf32>
    %7 = arith.cmpf ogt, %5, %6 : vector<24x1xf32>
    %c0_6 = arith.constant 0 : index
    %c0_7 = arith.constant 0 : index
    %c0_8 = arith.constant 0 : index
    %8 = vector.load %arg2[%c0_6, %c0_7, %c0_8] : memref<1x32x16xf32, #tpu.memory_space<vmem>>, vector<1x32x16xf32>
    %9 = vector.shape_cast %8 : vector<1x32x16xf32> to vector<32x16xf32>
    %c0_9 = arith.constant 0 : index
    %c0_10 = arith.constant 0 : index
    %10 = vector.load %arg3[%c0_9, %c0_10] : memref<24x32xf32, #tpu.memory_space<vmem>>, vector<24x32xf32>
    %cst_11 = arith.constant dense<0.000000e+00> : vector<24x16xf32>
    %11 = tpu.matmul %10, %9, %cst_11 {dimension_numbers = #tpu.dot_dimension_numbers<[1], [0], [0], [1], [0, 0, 1, 1], [], []>} : vector<24x32xf32>, vector<32x16xf32>, vector<24x16xf32> -> vector<24x16xf32>
    %12 = vector.broadcast %0 : vector<24x1xf32> to vector<24x16xf32>
    %13 = arith.addf %11, %12 : vector<24x16xf32>
    %14 = arith.negf %13 : vector<24x16xf32>
    %15 = math.exp %14 : vector<24x16xf32>
    %cst_12 = arith.constant 1.000000e+00 : f32
    %16 = vector.broadcast %cst_12 : f32 to vector<24x16xf32>
    %17 = arith.addf %16, %15 : vector<24x16xf32>
    %18 = arith.divf %16, %17 : vector<24x16xf32>
    %c16_i32 = arith.constant 16 : i32
    %19 = arith.muli %arg1, %c16_i32 : i32
    %20 = tpu.iota {dimensions = array<i32: 1>} : vector<1x16xi32>
    %21 = vector.broadcast %19 : i32 to vector<1x16xi32>
    %22 = arith.addi %21, %20 : vector<1x16xi32>
    %23 = arith.sitofp %22 : vector<1x16xi32> to vector<1x16xf32>
    %cst_13 = arith.constant 5.000000e-01 : f32
    %24 = vector.broadcast %cst_13 : f32 to vector<1x16xf32>
    %25 = arith.addf %23, %24 : vector<1x16xf32>
    %cst_14 = arith.constant 2.500000e-01 : f32
    %26 = vector.broadcast %cst_14 : f32 to vector<1x16xf32>
    %27 = arith.mulf %25, %26 : vector<1x16xf32>
    %28 = math.floor %27 : vector<1x16xf32>
    %cst_15 = arith.constant 4.000000e+00 : f32
    %29 = vector.broadcast %cst_15 : f32 to vector<1x16xf32>
    %30 = arith.mulf %28, %29 : vector<1x16xf32>
    %31 = arith.subf %23, %30 : vector<1x16xf32>
    %cst_16 = arith.constant 1.600000e+01 : f32
    %32 = vector.broadcast %cst_16 : f32 to vector<1x16xf32>
    %33 = arith.mulf %31, %32 : vector<1x16xf32>
    %cst_17 = arith.constant 8.000000e+00 : f32
    %34 = vector.broadcast %cst_17 : f32 to vector<1x16xf32>
    %35 = arith.subf %33, %34 : vector<1x16xf32>
    %cst_18 = arith.constant 1.600000e+01 : f32
    %36 = vector.broadcast %cst_18 : f32 to vector<1x16xf32>
    %37 = arith.mulf %28, %36 : vector<1x16xf32>
    %cst_19 = arith.constant 8.000000e+00 : f32
    %38 = vector.broadcast %cst_19 : f32 to vector<1x16xf32>
    %39 = arith.subf %37, %38 : vector<1x16xf32>
    %40 = vector.broadcast %3 : vector<24x1xf32> to vector<24x16xf32>
    %41 = vector.broadcast %35 : vector<1x16xf32> to vector<24x16xf32>
    %42 = arith.mulf %40, %41 : vector<24x16xf32>
    %43 = vector.broadcast %4 : vector<24x1xf32> to vector<24x16xf32>
    %44 = vector.broadcast %39 : vector<1x16xf32> to vector<24x16xf32>
    %45 = arith.mulf %43, %44 : vector<24x16xf32>
    %46 = arith.addf %42, %45 : vector<24x16xf32>
    %47 = vector.broadcast %2 : vector<24x1xf32> to vector<24x16xf32>
    %48 = arith.mulf %47, %18 : vector<24x16xf32>
    %49 = arith.mulf %48, %18 : vector<24x16xf32>
    %50 = vector.broadcast %1 : vector<24x1xf32> to vector<24x16xf32>
    %51 = arith.mulf %50, %18 : vector<24x16xf32>
    %52 = arith.addf %51, %46 : vector<24x16xf32>
    %53 = vector.shape_cast %7 : vector<24x1xi1> to vector<24x1xi1>
    %54 = vector.broadcast %53 : vector<24x1xi1> to vector<24x16xi1>
    %55 = arith.select %54, %49, %52 : vector<24x16xi1>, vector<24x16xf32>
    %c0_20 = arith.constant 0 : index
    %c0_21 = arith.constant 0 : index
    %c0_22 = arith.constant 0 : index
    %56 = vector.load %arg5[%c0_20, %c0_21, %c0_22] : memref<1x24x16xf32, #tpu.memory_space<vmem>>, vector<1x24x16xf32>
    %57 = vector.shape_cast %56 : vector<1x24x16xf32> to vector<24x16xf32>
    %58 = vector.shape_cast %13 : vector<24x16xf32> to vector<1x24x16xf32>
    tpu.vector_store %arg5[%c0_20, %c0_21, %c0_22], %58 {strides = array<i32>} : memref<1x24x16xf32, #tpu.memory_space<vmem>>, vector<1x24x16xf32>,
    %c0_23 = arith.constant 0 : index
    %c0_24 = arith.constant 0 : index
    %c0_25 = arith.constant 0 : index
    %59 = vector.load %arg6[%c0_23, %c0_24, %c0_25] : memref<1x24x16xf32, #tpu.memory_space<vmem>>, vector<1x24x16xf32>
    %60 = vector.shape_cast %59 : vector<1x24x16xf32> to vector<24x16xf32>
    %61 = vector.shape_cast %55 : vector<24x16xf32> to vector<1x24x16xf32>
    tpu.vector_store %arg6[%c0_23, %c0_24, %c0_25], %61 {strides = array<i32>} : memref<1x24x16xf32, #tpu.memory_space<vmem>>, vector<1x24x16xf32>,
    return
  }
  func.func @transform_0(%arg0: i32, %arg1: i32) -> (i32, i32, i32) {
    %c0_i32 = arith.constant 0 : i32
    %c0_i32_0 = arith.constant 0 : i32
    return %arg0, %c0_i32, %arg1 : i32, i32, i32
  }
  func.func @transform_1(%arg0: i32, %arg1: i32) -> (i32, i32) {
    %c0_i32 = arith.constant 0 : i32
    %c0_i32_0 = arith.constant 0 : i32
    %c0_i32_1 = arith.constant 0 : i32
    return %c0_i32, %c0_i32_0 : i32, i32
  }
  func.func @transform_2(%arg0: i32, %arg1: i32) -> (i32, i32) {
    %c0_i32 = arith.constant 0 : i32
    %c0_i32_0 = arith.constant 0 : i32
    %c0_i32_1 = arith.constant 0 : i32
    return %c0_i32, %c0_i32_0 : i32, i32
  }
  func.func @transform_3(%arg0: i32, %arg1: i32) -> (i32, i32, i32) {
    %c0_i32 = arith.constant 0 : i32
    %c0_i32_0 = arith.constant 0 : i32
    return %arg0, %c0_i32, %arg1 : i32, i32, i32
  }
  func.func @transform_4(%arg0: i32, %arg1: i32) -> (i32, i32, i32) {
    %c0_i32 = arith.constant 0 : i32
    %c0_i32_0 = arith.constant 0 : i32
    return %arg0, %c0_i32, %arg1 : i32, i32, i32
  }
}

</mosaic_0001>

<llo_original>
// kernel: yolov7_head_forward.5
$region0: #{yolov7_head_forward.5}
  #allocation0 [shape = 'u32[]', space=smem, size = 0x4, offset = 0x4, fixed_abs, tag = 'smem constant byte address 0x4 - core index']
  #allocation1 [shape = 'u32[144,128]{1,0:T(1,128)}', space=vmem, size = 0x12000, scoped, tag = 'internal scratch']
  %s0 = inlined_call_operand.vmem [shape: f32[2,64,4], index: 0, kind: input, shape index: {}]
  %s1 = inlined_call_operand.vmem [shape: f32[24,64], index: 1, kind: input, shape index: {}]
  %s2 = inlined_call_operand.vmem [shape: f32[24,6], index: 2, kind: input, shape index: {}]
  %s3 = inlined_call_operand.vmem [shape: f32[2,24,4], index: 3, kind: output, shape index: {0}]
  %s4 = inlined_call_operand.vmem [shape: f32[2,24,4], index: 4, kind: output, shape index: {1}]
  %5 = xla_tuple %s3, %s4
  %s6 = sld [smem:[#allocation0]]
  $region53: #{yolov7_head_forward.5} parent=0
    _
  %s8 = ssub.s32 1, %s6
  %s9 = scalar_select 0, %s8, %s6
  loop: start=0, step=1, limit=4
  $region2: #{yolov7_head_forward.5} parent=0 // loop_pre_header
    _
  $region3: #{yolov7_head_forward.5} parent=0 // loop_header
    %s11 = sphi 0, %s15
    %p12 = scmp.ge.s32.totalorder %s11, 4
    %s18 = sphi 0, %s30
    %s19 = sphi 0, %s26
    %s20 = sphi 0, %s18
    %s21 = sphi 0, %s19
    %s22 = sphi 0, %s20
    %s23 = sphi 0, %s21
    %s35 = sphi 0, %s37
    %s38 = sphi 0, %s35
    %s39 = sphi 0, %s38
    %s55 = sphi 0, %s39
    %s59 = sphi 0, %s59
    %s61 = sphi 0, %s59
    %s62 = sphi 0, %s61
    %s76 = sphi 0, %s62
    %s80 = sphi 0, %s80
    %s82 = sphi 0, %s80
    %s83 = sphi 0, %s82
    %s97 = sphi 0, %s83
    %s105 = sphi 0, %s107
    %s108 = sphi 0, %s105
    %s109 = sphi 0, %s108
    %s125 = sphi 0, %s109
    %s133 = sphi 0, %s135
    %s136 = sphi 0, %s133
    %s137 = sphi 0, %s136
    %s153 = sphi 0, %s137
  $region4: #{yolov7_head_forward.5} parent=0 // loop_header_branch
    %14 = sbr.rel (%p12) target = $region8
  $region5: #{yolov7_head_forward.5} parent=0 // loop_body
    %s16 = ssub.s32 %s11, 1
    %s17 = ssub.s32 %s11, 2
    %s24 = sadd.s32 1, %s19
    %p25 = scmp.ge.s32.totalorder %s24, 1
    %s26 = scalar_select %p25, 0, %s24
    %s27 = sadd.s32 1, %s18
    %s28 = scalar_select %p25, %s27, %s18
    %p29 = scmp.ge.s32.totalorder %s28, 2
    %s30 = scalar_select %p29, 0, %s28
    %s31 = ssub.s32 %s18, %s30
    %s32 = ssub.s32 %s19, %s26
    %s33 = sor.u32 %s31, %s32
    %p34 = scmp.eq.s32.totalorder %s33, 0
    %s36 = sadd.s32 %s35, 1
    %s37 = scalar_select %p34, %s35, %s36
    %p40 = pneg %p34
    %p41 = scmp.eq.s32.totalorder %s11, 1
    %p42 = por %p40, %p41
    %p43 = scmp.ne.s32.totalorder %s35, %s38
    %p44 = scmp.eq.s32.totalorder %s11, 0
    %p45 = por %p43, %p44
    %p46 = scmp.ne.s32.totalorder %s35, %s38
    %p47 = scmp.eq.s32.totalorder %s16, 1
    %p48 = por %p46, %p47
    %p49 = scmp.ne.s32.totalorder %s38, %s39
    %p50 = scmp.eq.s32.totalorder %s16, 0
    %p51 = por %p49, %p50
    %p52 = scmp.ne.s32.totalorder %s38, %s39
    %p53 = scmp.eq.s32.totalorder %s17, 1
    %p54 = por %p52, %p53
    %p56 = scmp.ne.s32.totalorder %s39, %s55
    %p57 = scmp.eq.s32.totalorder %s17, 0
    %p58 = por %p56, %p57
    %s60 = sadd.s32 %s59, 1
    %p63 = scmp.eq.s32.totalorder %s11, 1
    %p64 = scmp.ne.s32.totalorder %s59, %s61
    %p65 = scmp.eq.s32.totalorder %s11, 0
    %p66 = por %p64, %p65
    %p67 = scmp.ne.s32.totalorder %s59, %s61
    %p68 = scmp.eq.s32.totalorder %s16, 1
    %p69 = por %p67, %p68
    %p70 = scmp.ne.s32.totalorder %s61, %s62
    %p71 = scmp.eq.s32.totalorder %s16, 0
    %p72 = por %p70, %p71
    %p73 = scmp.ne.s32.totalorder %s61, %s62
    %p74 = scmp.eq.s32.totalorder %s17, 1
    %p75 = por %p73, %p74
    %p77 = scmp.ne.s32.totalorder %s62, %s76
    %p78 = scmp.eq.s32.totalorder %s17, 0
    %p79 = por %p77, %p78
    %s81 = sadd.s32 %s80, 1
    %p84 = scmp.eq.s32.totalorder %s11, 1
    %p85 = scmp.ne.s32.totalorder %s80, %s82
    %p86 = scmp.eq.s32.totalorder %s11, 0
    %p87 = por %p85, %p86
    %p88 = scmp.ne.s32.totalorder %s80, %s82
    %p89 = scmp.eq.s32.totalorder %s16, 1
    %p90 = por %p88, %p89
    %p91 = scmp.ne.s32.totalorder %s82, %s83
    %p92 = scmp.eq.s32.totalorder %s16, 0
    %p93 = por %p91, %p92
    %p94 = scmp.ne.s32.totalorder %s82, %s83
    %p95 = scmp.eq.s32.totalorder %s17, 1
    %p96 = por %p94, %p95
    %p98 = scmp.ne.s32.totalorder %s83, %s97
    %p99 = scmp.eq.s32.totalorder %s17, 0
    %p100 = por %p98, %p99
    %s101 = ssub.s32 %s18, %s30
    %s102 = ssub.s32 %s19, %s26
    %s103 = sor.u32 %s101, %s102
    %p104 = scmp.eq.s32.totalorder %s103, 0
    %s106 = sadd.s32 %s105, 1
    %s107 = scalar_select %p104, %s105, %s106
    %p110 = pneg %p104
    %p111 = scmp.eq.s32.totalorder %s11, 1
    %p112 = por %p110, %p111
    %p113 = scmp.ne.s32.totalorder %s105, %s108
    %p114 = scmp.eq.s32.totalorder %s11, 0
    %p115 = por %p113, %p114
    %p116 = scmp.ne.s32.totalorder %s105, %s108
    %p117 = scmp.eq.s32.totalorder %s16, 1
    %p118 = por %p116, %p117
    %p119 = scmp.ne.s32.totalorder %s108, %s109
    %p120 = scmp.eq.s32.totalorder %s16, 0
    %p121 = por %p119, %p120
    %p122 = scmp.ne.s32.totalorder %s108, %s109
    %p123 = scmp.eq.s32.totalorder %s17, 1
    %p124 = por %p122, %p123
    %p126 = scmp.ne.s32.totalorder %s109, %s125
    %p127 = scmp.eq.s32.totalorder %s17, 0
    %p128 = por %p126, %p127
    %s129 = ssub.s32 %s18, %s30
    %s130 = ssub.s32 %s19, %s26
    %s131 = sor.u32 %s129, %s130
    %p132 = scmp.eq.s32.totalorder %s131, 0
    %s134 = sadd.s32 %s133, 1
    %s135 = scalar_select %p132, %s133, %s134
    %p138 = pneg %p132
    %p139 = scmp.eq.s32.totalorder %s11, 1
    %p140 = por %p138, %p139
    %p141 = scmp.ne.s32.totalorder %s133, %s136
    %p142 = scmp.eq.s32.totalorder %s11, 0
    %p143 = por %p141, %p142
    %p144 = scmp.ne.s32.totalorder %s133, %s136
    %p145 = scmp.eq.s32.totalorder %s16, 1
    %p146 = por %p144, %p145
    %p147 = scmp.ne.s32.totalorder %s136, %s137
    %p148 = scmp.eq.s32.totalorder %s16, 0
    %p149 = por %p147, %p148
    %p150 = scmp.ne.s32.totalorder %s136, %s137
    %p151 = scmp.eq.s32.totalorder %s17, 1
    %p152 = por %p150, %p151
    %p154 = scmp.ne.s32.totalorder %s137, %s153
    %p155 = scmp.eq.s32.totalorder %s17, 0
    %p156 = por %p154, %p155
    %p157 = scmp.le.s32.totalorder 1, %s11
    %p158 = scmp.lt.s32.totalorder %s11, 3
    %p159 = pnand %p157, %p158
    %p160 = pneg %p159
    // Predicated region
    $region9: #{yolov7_head_forward.5} parent=5 // pred_check
      _
    $region10: #{yolov7_head_forward.5} parent=5 // pred_check_branch
      %162 = sbr.rel (%p159) target = $region12
    $region11: #{yolov7_head_forward.5} parent=5 // pred_region
      %s163 = ssub.s32 %s11, 1
      // Predicated region
      $region13: #{yolov7_head_forward.5} parent=11 // pred_check
        %p164 = pneg %p72
      $region14: #{yolov7_head_forward.5} parent=11 // pred_check_branch
        %166 = sbr.rel (%p164) target = $region16
      $region15: #{yolov7_head_forward.5} parent=11 // pred_region
        _
      $region16: #{yolov7_head_forward.5} parent=11 // pred_fallthru
        _
      // Predicated region
      $region17: #{yolov7_head_forward.5} parent=11 // pred_check
        %p167 = pneg %p93
      $region18: #{yolov7_head_forward.5} parent=11 // pred_check_branch
        %169 = sbr.rel (%p167) target = $region20
      $region19: #{yolov7_head_forward.5} parent=11 // pred_region
        _
      $region20: #{yolov7_head_forward.5} parent=11 // pred_fallthru
        _
    $region12: #{yolov7_head_forward.5} parent=5 // pred_fallthru
      _
    %p170 = scmp.lt.s32.totalorder %s11, 2
    // Predicated region
    $region21: #{yolov7_head_forward.5} parent=5 // pred_check
      %p171 = pneg %p170
    $region22: #{yolov7_head_forward.5} parent=5 // pred_check_branch
      %173 = sbr.rel (%p171) target = $region24
    $region23: #{yolov7_head_forward.5} parent=5 // pred_region
      // Predicated region
      $region25: #{yolov7_head_forward.5} parent=23 // pred_check
        %p174 = pneg %p45
      $region26: #{yolov7_head_forward.5} parent=23 // pred_check_branch
        %176 = sbr.rel (%p174) target = $region28
      $region27: #{yolov7_head_forward.5} parent=23 // pred_region
        %p177 = scmp.lt.s32.totalorder %s18, 1
        %s178 = scalar_select %p177, %s18, 1
        %p179 = scmp.lt.s32.totalorder %s19, 0
        %s180 = scalar_select %p179, %s19, 0
        %s181 = smul.addr %s178, 8
        %s182 = sadd.s32 %s180, %s181
        %s183 = smul.addr %s182, 8
        %s184 = scalar_lea.vmem %s0, %s183
      $region28: #{yolov7_head_forward.5} parent=23 // pred_fallthru
        _
    $region24: #{yolov7_head_forward.5} parent=5 // pred_fallthru
      _
    %p185 = scmp.le.s32.totalorder 1, %s11
    %p186 = scmp.lt.s32.totalorder %s11, 3
    %p187 = pnand %p185, %p186
    %p188 = pneg %p187
    // Predicated region
    $region29: #{yolov7_head_forward.5} parent=5 // pred_check
      _
    $region30: #{yolov7_head_forward.5} parent=5 // pred_check_branch
      %190 = sbr.rel (%p187) target = $region32
    $region31: #{yolov7_head_forward.5} parent=5 // pred_region
      %s191 = ssub.s32 %s11, 1
      %p192 = scmp.lt.s32.totalorder %s20, 1
      %s193 = scalar_select %p192, %s20, 1
      %p194 = scmp.lt.s32.totalorder %s21, 0
      %s195 = scalar_select %p194, %s21, 0
      %s196 = smul.addr %s193, 8
      %s197 = sadd.s32 %s195, %s196
      %s198 = smul.addr %s197, 8
      %s199 = scalar_lea.vmem %s0, %s198
      %p200 = pneg %p51
      %p201 = pneg %p48
      %p202 = pneg %p72
      %p203 = pneg %p69
      %p204 = pneg %p93
      %p205 = pneg %p90
      %p206 = pneg %p121
      %p207 = pneg %p118
      %p208 = scmp.lt.s32.totalorder %s20, 1
      %s209 = scalar_select %p208, %s20, 1
      %p210 = scmp.lt.s32.totalorder %s21, 0
      %s211 = scalar_select %p210, %s21, 0
      %s212 = smul.addr %s209, 3
      %s213 = sadd.s32 %s211, %s212
      %s214 = smul.addr %s213, 8
      %s215 = scalar_lea.vmem %s3, %s214
      %p216 = pneg %p149
      %p217 = pneg %p146
      %p218 = scmp.lt.s32.totalorder %s20, 1
      %s219 = scalar_select %p218, %s20, 1
      %p220 = scmp.lt.s32.totalorder %s21, 0
      %s221 = scalar_select %p220, %s21, 0
      %s222 = smul.addr %s219, 3
      %s223 = sadd.s32 %s221, %s222
      %s224 = smul.addr %s223, 8
      %s225 = scalar_lea.vmem %s4, %s224
      %p226 = scmp.lt.s32.totalorder %s20, 1
      %s227 = scalar_select %p226, %s20, 1
      %p228 = scmp.lt.s32.totalorder %s21, 0
      %s229 = scalar_select %p228, %s21, 0
      %s230 = smul.addr %s227, 8
      %s231 = sadd.s32 %s229, %s230
      %s232 = smul.addr %s231, 8
      %s233 = scalar_lea.vmem %s0, %s232
      %p234 = scmp.lt.s32.totalorder %s20, 1
      %s235 = scalar_select %p234, %s20, 1
      %p236 = scmp.lt.s32.totalorder %s21, 0
      %s237 = scalar_select %p236, %s21, 0
      %s238 = smul.addr %s235, 3
      %s239 = sadd.s32 %s237, %s238
      %s240 = smul.addr %s239, 8
      %s241 = scalar_lea.vmem %s3, %s240
      %p242 = scmp.lt.s32.totalorder %s20, 1
      %s243 = scalar_select %p242, %s20, 1
      %p244 = scmp.lt.s32.totalorder %s21, 0
      %s245 = scalar_select %p244, %s21, 0
      %s246 = smul.addr %s243, 3
      %s247 = sadd.s32 %s245, %s246
      %s248 = smul.addr %s247, 8
      %s249 = scalar_lea.vmem %s4, %s248
      %v250 = vld [vmem:[%s2] sm:$0xff]
      %v251 = vld [vmem:[%s2 + $0x8] sm:$0xff]
      %v252 = vld [vmem:[%s2 + $0x10] sm:$0xff]
      %vm253 = vcmp.gt.f32.partialorder %v250, 0.5
      %vm254 = vcmp.gt.f32.partialorder %v251, 0.5
      %vm255 = vcmp.gt.f32.partialorder %v252, 0.5
      %v256 = vld [vmem:[%s233] sm:$0xff]
      %v257 = vld [vmem:[%s233 + $0x8] sm:$0xff]
      %v258 = vld [vmem:[%s233 + $0x10] sm:$0xff]
      %v259 = vld [vmem:[%s233 + $0x18] sm:$0xff]
      %v260 = vld [vmem:[%s233 + $0x20] sm:$0xff]
      %v261 = vld [vmem:[%s233 + $0x28] sm:$0xff]
      %v262 = vld [vmem:[%s233 + $0x30] sm:$0xff]
      %v263 = vld [vmem:[%s233 + $0x38] sm:$0xff]
      %v264 = vld [vmem:[%s1] sm:$0xff]
      %v265 = vld [vmem:[%s1 + $0x8] sm:$0xff]
      %v266 = vld [vmem:[%s1 + $0x10] sm:$0xff]
      %268 = vset.pattern.permute.xlu0 0
      %269 = vperm.xlu0 %268, %v250
      %v270 = vpop.permute.xlu0 %269
      %273 = vset.pattern.permute.xlu0 0
      %274 = vperm.xlu0 %273, %v251
      %v275 = vpop.permute.xlu0 %274
      %278 = vset.pattern.permute.xlu0 0
      %279 = vperm.xlu0 %278, %v252
      %v280 = vpop.permute.xlu0 %279
      %vm282 = vcmask 523264
      %v284 = vsel %vm282, %v264, 0
      %v287 = vsel %vm282, %v265, 0
      %v290 = vsel %vm282, %v266, 0
      %292 = vmatprep.subr.mxu0 0.0
      %293 = vmatpush1.msra.mxu0 0.0
      %294 = vmatprep.subr.mxu0 0.0
      %295 = vmatpush1.msra.mxu0 0.0
      %296 = vmatprep.subr.mxu0 0.0
      %297 = vmatpush1.msra.mxu0 0.0
      %298 = vmatprep.subr.mxu0 0.0
      %299 = vmatpush1.msra.mxu0 0.0
      %300 = vmatprep.subr.mxu0 0.0
      %301 = vmatpush1.msra.mxu0 0.0
      %302 = vmatprep.subr.mxu0 0.0
      %303 = vmatpush1.msra.mxu0 0.0
      %304 = vmatprep.subr.mxu0 0.0
      %305 = vmatpush1.msra.mxu0 0.0
      %306 = vmatprep.subr.mxu0 0.0
      %307 = vmatpush1.msra.mxu0 0.0
      %308 = vmatprep.subr.mxu0 0.0
      %309 = vmatpush1.msra.mxu0 %v263
      %310 = vmatprep.subr.mxu0 0.0
      %311 = vmatpush1.msra.mxu0 %v262
      %312 = vmatprep.subr.mxu0 0.0
      %313 = vmatpush1.msra.mxu0 %v261
      %314 = vmatprep.subr.mxu0 0.0
      %315 = vmatpush1.msra.mxu0 %v260
      %316 = vmatprep.subr.mxu0 0.0
      %317 = vmatpush1.msra.mxu0 %v259
      %318 = vmatprep.subr.mxu0 0.0
      %319 = vmatpush1.msra.mxu0 %v258
      %320 = vmatprep.subr.mxu0 0.0
      %321 = vmatpush1.msra.mxu0 %v257
      %322 = vmatprep.subr.mxu0 0.0
      %323 = vmatpush1.msra.mxu0 %v256
      %324 = vmatprep.subr.mxu0 0.0
      %325 = vmatpush2.msra.mxu0 0.0
      %326 = vmatprep.subr.mxu0 0.0
      %327 = vmatpush2.msra.mxu0 0.0
      %328 = vmatprep.subr.mxu0 0.0
      %329 = vmatpush2.msra.mxu0 0.0
      %330 = vmatprep.subr.mxu0 0.0
      %331 = vmatpush2.msra.mxu0 0.0
      %332 = vmatprep.subr.mxu0 0.0
      %333 = vmatpush2.msra.mxu0 0.0
      %334 = vmatprep.subr.mxu0 0.0
      %335 = vmatpush2.msra.mxu0 0.0
      %336 = vmatprep.subr.mxu0 0.0
      %337 = vmatpush2.msra.mxu0 0.0
      %338 = vmatprep.subr.mxu0 0.0
      %339 = vmatpush2.msra.mxu0 0.0
      %340 = vmatprep.subr.mxu0 0.0
      %341 = vmatpush2.msra.mxu0 0.0
      %342 = vmatprep.subr.mxu0 0.0
      %343 = vmatpush2.msra.mxu0 0.0
      %344 = vmatprep.subr.mxu0 0.0
      %345 = vmatpush2.msra.mxu0 0.0
      %346 = vmatprep.subr.mxu0 0.0
      %347 = vmatpush2.msra.mxu0 0.0
      %348 = vmatprep.subr.mxu0 0.0
      %349 = vmatpush2.msra.mxu0 0.0
      %350 = vmatprep.subr.mxu0 0.0
      %351 = vmatpush2.msra.mxu0 0.0
      %352 = vmatprep.subr.mxu0 0.0
      %353 = vmatpush2.msra.mxu0 0.0
      %354 = vmatprep.subr.mxu0 0.0
      %355 = vmatpush2.msra.mxu0 0.0
      %356 = vmatprep.mubr.f32.mxu0 0.0
      %357 = vmatmul.mubr.f32.gmra.mxu0 %v284
      %v358 = vpop.f32.mrf.mxu0
      %v359 = vadd.f32 %v270, %v358
      %v360 = vpop.f32.mrf.mxu0
      %361 = vmatprep.mubr.f32.mxu0 0.0
      %362 = vmatmul.mubr.f32.gmra.mxu0 %v287
      %v363 = vpop.f32.mrf.mxu0
      %v364 = vadd.f32 %v275, %v363
      %v365 = vpop.f32.mrf.mxu0
      %366 = vmatprep.mubr.f32.mxu0 0.0
      %367 = vmatmul.mubr.f32.gmra.mxu0 %v290
      %v368 = vpop.f32.mrf.mxu0
      %v369 = vadd.f32 %v280, %v368
      %v370 = vpop.f32.mrf.mxu0
      %371 = vdwg.mxu0
      %v372 = vxor.u32 %v359, 2147483648
      %v373 = vxor.u32 %v364, 2147483648
      %v374 = vxor.u32 %v369, 2147483648
      %v375 = vmul.f32 %v372, 1.442695
      %v376 = vpow.pop %v375
      %v377 = vmul.f32 %v373, 1.442695
      %v378 = vpow.pop %v377
      %v379 = vmul.f32 %v374, 1.442695
      %v380 = vpow.pop %v379
      %v381 = vadd.f32 %v376, 1.0
      %v382 = vadd.f32 %v378, 1.0
      %v383 = vadd.f32 %v380, 1.0
      %v384 = vrcp.pop %v381
      %v385 = vmul.f32 1.0, %v384
      %v386 = vrcp.pop %v382
      %v387 = vmul.f32 1.0, %v386
      %v388 = vrcp.pop %v383
      %v389 = vmul.f32 1.0, %v388
      %s390 = smul.u32 %s21, 4
      %v391 = vlaneseq
      %v392 = vand.u32 %v391, 127
      %v393 = vstv %s390
      %v394 = vadd.s32 %v393, %v392
      %v395 = vcvt.s32.f32 %v394
      %v396 = vadd.f32 %v395, 0.5
      %v397 = vmul.f32 %v396, 0.5
      %v398 = vfloor.f32 %v397
      %v399 = vmul.f32 %v398, 2.0
      %v400 = vsub.f32 %v395, %v399
      %v401 = vmul.f32 %v400, 32.0
      %v402 = vsub.f32 %v401, 16.0
      %v403 = vmul.f32 %v398, 32.0
      %v404 = vsub.f32 %v403, 16.0
      %405 = vset.pattern.permute.xlu0 3
      %406 = vperm.xlu0 %405, %v250
      %v407 = vpop.permute.xlu0 %406
      %409 = vset.pattern.permute.xlu0 3
      %410 = vperm.xlu0 %409, %v251
      %v411 = vpop.permute.xlu0 %410
      %413 = vset.pattern.permute.xlu0 3
      %414 = vperm.xlu0 %413, %v252
      %v415 = vpop.permute.xlu0 %414
      %v417 = vmul.f32 %v407, %v402
      %v418 = vmul.f32 %v411, %v402
      %v419 = vmul.f32 %v415, %v402
      %420 = vset.pattern.permute.xlu0 4
      %421 = vperm.xlu0 %420, %v250
      %v422 = vpop.permute.xlu0 %421
      %424 = vset.pattern.permute.xlu0 4
      %425 = vperm.xlu0 %424, %v251
      %v426 = vpop.permute.xlu0 %425
      %428 = vset.pattern.permute.xlu0 4
      %429 = vperm.xlu0 %428, %v252
      %v430 = vpop.permute.xlu0 %429
      %v432 = vmul.f32 %v422, %v404
      %v433 = vmul.f32 %v426, %v404
      %v434 = vmul.f32 %v430, %v404
      %v435 = vadd.f32 %v417, %v432
      %v436 = vadd.f32 %v418, %v433
      %v437 = vadd.f32 %v419, %v434
      %438 = vset.pattern.permute.xlu0 2
      %439 = vperm.xlu0 %438, %v250
      %v440 = vpop.permute.xlu0 %439
      %442 = vset.pattern.permute.xlu0 2
      %443 = vperm.xlu0 %442, %v251
      %v444 = vpop.permute.xlu0 %443
      %446 = vset.pattern.permute.xlu0 2
      %447 = vperm.xlu0 %446, %v252
      %v448 = vpop.permute.xlu0 %447
      %v450 = vmul.f32 %v440, %v385
      %v451 = vmul.f32 %v444, %v387
      %v452 = vmul.f32 %v448, %v389
      %v453 = vmul.f32 %v450, %v385
      %v454 = vmul.f32 %v451, %v387
      %v455 = vmul.f32 %v452, %v389
      %456 = vset.pattern.permute.xlu0 1
      %457 = vperm.xlu0 %456, %v250
      %v458 = vpop.permute.xlu0 %457
      %460 = vset.pattern.permute.xlu0 1
      %461 = vperm.xlu0 %460, %v251
      %v462 = vpop.permute.xlu0 %461
      %464 = vset.pattern.permute.xlu0 1
      %465 = vperm.xlu0 %464, %v252
      %v466 = vpop.permute.xlu0 %465
      %v468 = vmul.f32 %v458, %v385
      %v469 = vmul.f32 %v462, %v387
      %v470 = vmul.f32 %v466, %v389
      %v471 = vadd.f32 %v468, %v435
      %v472 = vadd.f32 %v469, %v436
      %v473 = vadd.f32 %v470, %v437
      %v474 = vsel %vm253, 1, 0
      %v475 = vsel %vm254, 1, 0
      %v476 = vsel %vm255, 1, 0
      %477 = vset.pattern.permute.xlu0 5
      %478 = vperm.xlu0 %477, %v474
      %v479 = vpop.permute.xlu0 %478
      %480 = vset.pattern.permute.xlu0 5
      %481 = vperm.xlu0 %480, %v475
      %v482 = vpop.permute.xlu0 %481
      %483 = vset.pattern.permute.xlu0 5
      %484 = vperm.xlu0 %483, %v476
      %v485 = vpop.permute.xlu0 %484
      %vm486 = vcmp.eq.s32.totalorder %v479, 1
      %vm487 = vcmp.eq.s32.totalorder %v482, 1
      %vm488 = vcmp.eq.s32.totalorder %v485, 1
      %v489 = vsel %vm486, %v453, %v471
      %v490 = vsel %vm487, %v454, %v472
      %v491 = vsel %vm488, %v455, %v473
      %vm492 = vcmask 31744
      %493 = vst.msk [vmem:[%s241] sm:$0xff] %vm492, %v359
      %494 = vst.msk [vmem:[%s241 + $0x8] sm:$0xff] %vm492, %v364
      %495 = vst.msk [vmem:[%s241 + $0x10] sm:$0xff] %vm492, %v369
      %496 = vst.msk [vmem:[%s249] sm:$0xff] %vm492, %v489
      %497 = vst.msk [vmem:[%s249 + $0x8] sm:$0xff] %vm492, %v490
      %498 = vst.msk [vmem:[%s249 + $0x10] sm:$0xff] %vm492, %v491
      %p499 = scmp.lt.s32.totalorder %s20, 1
      %s500 = scalar_select %p499, %s20, 1
      %p501 = scmp.lt.s32.totalorder %s21, 0
      %s502 = scalar_select %p501, %s21, 0
      %s503 = smul.addr %s500, 3
      %s504 = sadd.s32 %s502, %s503
      %s505 = smul.addr %s504, 8
      %s506 = scalar_lea.vmem %s3, %s505
      %p507 = scmp.lt.s32.totalorder %s20, 1
      %s508 = scalar_select %p507, %s20, 1
      %p509 = scmp.lt.s32.totalorder %s21, 0
      %s510 = scalar_select %p509, %s21, 0
      %s511 = smul.addr %s508, 3
      %s512 = sadd.s32 %s510, %s511
      %s513 = smul.addr %s512, 8
      %s514 = scalar_lea.vmem %s4, %s513
      // Predicated region
      $region33: #{yolov7_head_forward.5} parent=31 // pred_check
        %p515 = pneg %p118
      $region34: #{yolov7_head_forward.5} parent=31 // pred_check_branch
        %517 = sbr.rel (%p515) target = $region36
      $region35: #{yolov7_head_forward.5} parent=31 // pred_region
        _
      $region36: #{yolov7_head_forward.5} parent=31 // pred_fallthru
        _
      // Predicated region
      $region37: #{yolov7_head_forward.5} parent=31 // pred_check
        %p518 = pneg %p146
      $region38: #{yolov7_head_forward.5} parent=31 // pred_check_branch
        %520 = sbr.rel (%p518) target = $region40
      $region39: #{yolov7_head_forward.5} parent=31 // pred_region
        _
      $region40: #{yolov7_head_forward.5} parent=31 // pred_fallthru
        _
    $region32: #{yolov7_head_forward.5} parent=5 // pred_fallthru
      _
    %p521 = scmp.le.s32.totalorder 2, %s11
    // Predicated region
    $region41: #{yolov7_head_forward.5} parent=5 // pred_check
      %p522 = pneg %p521
    $region42: #{yolov7_head_forward.5} parent=5 // pred_check_branch
      %524 = sbr.rel (%p522) target = $region44
    $region43: #{yolov7_head_forward.5} parent=5 // pred_region
      %s525 = ssub.s32 %s11, 2
      // Predicated region
      $region45: #{yolov7_head_forward.5} parent=43 // pred_check
        %p526 = pneg %p124
      $region46: #{yolov7_head_forward.5} parent=43 // pred_check_branch
        %528 = sbr.rel (%p526) target = $region48
      $region47: #{yolov7_head_forward.5} parent=43 // pred_region
        %p529 = scmp.lt.s32.totalorder %s22, 1
        %s530 = scalar_select %p529, %s22, 1
        %p531 = scmp.lt.s32.totalorder %s23, 0
        %s532 = scalar_select %p531, %s23, 0
        %s533 = smul.addr %s530, 3
        %s534 = sadd.s32 %s532, %s533
        %s535 = smul.addr %s534, 8
        %s536 = scalar_lea.vmem %s3, %s535
      $region48: #{yolov7_head_forward.5} parent=43 // pred_fallthru
        _
      // Predicated region
      $region49: #{yolov7_head_forward.5} parent=43 // pred_check
        %p537 = pneg %p152
      $region50: #{yolov7_head_forward.5} parent=43 // pred_check_branch
        %539 = sbr.rel (%p537) target = $region52
      $region51: #{yolov7_head_forward.5} parent=43 // pred_region
        %p540 = scmp.lt.s32.totalorder %s22, 1
        %s541 = scalar_select %p540, %s22, 1
        %p542 = scmp.lt.s32.totalorder %s23, 0
        %s543 = scalar_select %p542, %s23, 0
        %s544 = smul.addr %s541, 3
        %s545 = sadd.s32 %s543, %s544
        %s546 = smul.addr %s545, 8
        %s547 = scalar_lea.vmem %s4, %s546
      $region52: #{yolov7_head_forward.5} parent=43 // pred_fallthru
        _
    $region44: #{yolov7_head_forward.5} parent=5 // pred_fallthru
      _
  $region6: #{yolov7_head_forward.5} parent=0 // loop_footer
    %s15 = sadd.s32 1, %s11
  $region7: #{yolov7_head_forward.5} parent=0 // loop_footer_branch
    %10 = sbr.rel target = $region3
  $region8: #{yolov7_head_forward.5} parent=0 // loop_exit
    _

// kernel: yolov7_head_forward.4
$region0: #{yolov7_head_forward.4}
  #allocation0 [shape = 'u32[]', space=smem, size = 0x4, offset = 0x4, fixed_abs, tag = 'smem constant byte address 0x4 - core index']
  #allocation1 [shape = 'u32[144,128]{1,0:T(1,128)}', space=vmem, size = 0x12000, scoped, tag = 'internal scratch']
  %s0 = inlined_call_operand.vmem [shape: f32[2,32,16], index: 0, kind: input, shape index: {}]
  %s1 = inlined_call_operand.vmem [shape: f32[24,32], index: 1, kind: input, shape index: {}]
  %s2 = inlined_call_operand.vmem [shape: f32[24,6], index: 2, kind: input, shape index: {}]
  %s3 = inlined_call_operand.vmem [shape: f32[2,24,16], index: 3, kind: output, shape index: {0}]
  %s4 = inlined_call_operand.vmem [shape: f32[2,24,16], index: 4, kind: output, shape index: {1}]
  %5 = xla_tuple %s3, %s4
  %s6 = sld [smem:[#allocation0]]
  $region53: #{yolov7_head_forward.4} parent=0
    _
  %s8 = ssub.s32 1, %s6
  %s9 = scalar_select 0, %s8, %s6
  loop: start=0, step=1, limit=4
  $region2: #{yolov7_head_forward.4} parent=0 // loop_pre_header
    _
  $region3: #{yolov7_head_forward.4} parent=0 // loop_header
    %s11 = sphi 0, %s15
    %p12 = scmp.ge.s32.totalorder %s11, 4
    %s18 = sphi 0, %s30
    %s19 = sphi 0, %s26
    %s20 = sphi 0, %s18
    %s21 = sphi 0, %s19
    %s22 = sphi 0, %s20
    %s23 = sphi 0, %s21
    %s35 = sphi 0, %s37
    %s38 = sphi 0, %s35
    %s39 = sphi 0, %s38
    %s55 = sphi 0, %s39
    %s59 = sphi 0, %s59
    %s61 = sphi 0, %s59
    %s62 = sphi 0, %s61
    %s76 = sphi 0, %s62
    %s80 = sphi 0, %s80
    %s82 = sphi 0, %s80
    %s83 = sphi 0, %s82
    %s97 = sphi 0, %s83
    %s105 = sphi 0, %s107
    %s108 = sphi 0, %s105
    %s109 = sphi 0, %s108
    %s125 = sphi 0, %s109
    %s133 = sphi 0, %s135
    %s136 = sphi 0, %s133
    %s137 = sphi 0, %s136
    %s153 = sphi 0, %s137
  $region4: #{yolov7_head_forward.4} parent=0 // loop_header_branch
    %14 = sbr.rel (%p12) target = $region8
  $region5: #{yolov7_head_forward.4} parent=0 // loop_body
    %s16 = ssub.s32 %s11, 1
    %s17 = ssub.s32 %s11, 2
    %s24 = sadd.s32 1, %s19
    %p25 = scmp.ge.s32.totalorder %s24, 1
    %s26 = scalar_select %p25, 0, %s24
    %s27 = sadd.s32 1, %s18
    %s28 = scalar_select %p25, %s27, %s18
    %p29 = scmp.ge.s32.totalorder %s28, 2
    %s30 = scalar_select %p29, 0, %s28
    %s31 = ssub.s32 %s18, %s30
    %s32 = ssub.s32 %s19, %s26
    %s33 = sor.u32 %s31, %s32
    %p34 = scmp.eq.s32.totalorder %s33, 0
    %s36 = sadd.s32 %s35, 1
    %s37 = scalar_select %p34, %s35, %s36
    %p40 = pneg %p34
    %p41 = scmp.eq.s32.totalorder %s11, 1
    %p42 = por %p40, %p41
    %p43 = scmp.ne.s32.totalorder %s35, %s38
    %p44 = scmp.eq.s32.totalorder %s11, 0
    %p45 = por %p43, %p44
    %p46 = scmp.ne.s32.totalorder %s35, %s38
    %p47 = scmp.eq.s32.totalorder %s16, 1
    %p48 = por %p46, %p47
    %p49 = scmp.ne.s32.totalorder %s38, %s39
    %p50 = scmp.eq.s32.totalorder %s16, 0
    %p51 = por %p49, %p50
    %p52 = scmp.ne.s32.totalorder %s38, %s39
    %p53 = scmp.eq.s32.totalorder %s17, 1
    %p54 = por %p52, %p53
    %p56 = scmp.ne.s32.totalorder %s39, %s55
    %p57 = scmp.eq.s32.totalorder %s17, 0
    %p58 = por %p56, %p57
    %s60 = sadd.s32 %s59, 1
    %p63 = scmp.eq.s32.totalorder %s11, 1
    %p64 = scmp.ne.s32.totalorder %s59, %s61
    %p65 = scmp.eq.s32.totalorder %s11, 0
    %p66 = por %p64, %p65
    %p67 = scmp.ne.s32.totalorder %s59, %s61
    %p68 = scmp.eq.s32.totalorder %s16, 1
    %p69 = por %p67, %p68
    %p70 = scmp.ne.s32.totalorder %s61, %s62
    %p71 = scmp.eq.s32.totalorder %s16, 0
    %p72 = por %p70, %p71
    %p73 = scmp.ne.s32.totalorder %s61, %s62
    %p74 = scmp.eq.s32.totalorder %s17, 1
    %p75 = por %p73, %p74
    %p77 = scmp.ne.s32.totalorder %s62, %s76
    %p78 = scmp.eq.s32.totalorder %s17, 0
    %p79 = por %p77, %p78
    %s81 = sadd.s32 %s80, 1
    %p84 = scmp.eq.s32.totalorder %s11, 1
    %p85 = scmp.ne.s32.totalorder %s80, %s82
    %p86 = scmp.eq.s32.totalorder %s11, 0
    %p87 = por %p85, %p86
    %p88 = scmp.ne.s32.totalorder %s80, %s82
    %p89 = scmp.eq.s32.totalorder %s16, 1
    %p90 = por %p88, %p89
    %p91 = scmp.ne.s32.totalorder %s82, %s83
    %p92 = scmp.eq.s32.totalorder %s16, 0
    %p93 = por %p91, %p92
    %p94 = scmp.ne.s32.totalorder %s82, %s83
    %p95 = scmp.eq.s32.totalorder %s17, 1
    %p96 = por %p94, %p95
    %p98 = scmp.ne.s32.totalorder %s83, %s97
    %p99 = scmp.eq.s32.totalorder %s17, 0
    %p100 = por %p98, %p99
    %s101 = ssub.s32 %s18, %s30
    %s102 = ssub.s32 %s19, %s26
    %s103 = sor.u32 %s101, %s102
    %p104 = scmp.eq.s32.totalorder %s103, 0
    %s106 = sadd.s32 %s105, 1
    %s107 = scalar_select %p104, %s105, %s106
    %p110 = pneg %p104
    %p111 = scmp.eq.s32.totalorder %s11, 1
    %p112 = por %p110, %p111
    %p113 = scmp.ne.s32.totalorder %s105, %s108
    %p114 = scmp.eq.s32.totalorder %s11, 0
    %p115 = por %p113, %p114
    %p116 = scmp.ne.s32.totalorder %s105, %s108
    %p117 = scmp.eq.s32.totalorder %s16, 1
    %p118 = por %p116, %p117
    %p119 = scmp.ne.s32.totalorder %s108, %s109
    %p120 = scmp.eq.s32.totalorder %s16, 0
    %p121 = por %p119, %p120
    %p122 = scmp.ne.s32.totalorder %s108, %s109
    %p123 = scmp.eq.s32.totalorder %s17, 1
    %p124 = por %p122, %p123
    %p126 = scmp.ne.s32.totalorder %s109, %s125
    %p127 = scmp.eq.s32.totalorder %s17, 0
    %p128 = por %p126, %p127
    %s129 = ssub.s32 %s18, %s30
    %s130 = ssub.s32 %s19, %s26
    %s131 = sor.u32 %s129, %s130
    %p132 = scmp.eq.s32.totalorder %s131, 0
    %s134 = sadd.s32 %s133, 1
    %s135 = scalar_select %p132, %s133, %s134
    %p138 = pneg %p132
    %p139 = scmp.eq.s32.totalorder %s11, 1
    %p140 = por %p138, %p139
    %p141 = scmp.ne.s32.totalorder %s133, %s136
    %p142 = scmp.eq.s32.totalorder %s11, 0
    %p143 = por %p141, %p142
    %p144 = scmp.ne.s32.totalorder %s133, %s136
    %p145 = scmp.eq.s32.totalorder %s16, 1
    %p146 = por %p144, %p145
    %p147 = scmp.ne.s32.totalorder %s136, %s137
    %p148 = scmp.eq.s32.totalorder %s16, 0
    %p149 = por %p147, %p148
    %p150 = scmp.ne.s32.totalorder %s136, %s137
    %p151 = scmp.eq.s32.totalorder %s17, 1
    %p152 = por %p150, %p151
    %p154 = scmp.ne.s32.totalorder %s137, %s153
    %p155 = scmp.eq.s32.totalorder %s17, 0
    %p156 = por %p154, %p155
    %p157 = scmp.le.s32.totalorder 1, %s11
    %p158 = scmp.lt.s32.totalorder %s11, 3
    %p159 = pnand %p157, %p158
    %p160 = pneg %p159
    // Predicated region
    $region9: #{yolov7_head_forward.4} parent=5 // pred_check
      _
    $region10: #{yolov7_head_forward.4} parent=5 // pred_check_branch
      %162 = sbr.rel (%p159) target = $region12
    $region11: #{yolov7_head_forward.4} parent=5 // pred_region
      %s163 = ssub.s32 %s11, 1
      // Predicated region
      $region13: #{yolov7_head_forward.4} parent=11 // pred_check
        %p164 = pneg %p72
      $region14: #{yolov7_head_forward.4} parent=11 // pred_check_branch
        %166 = sbr.rel (%p164) target = $region16
      $region15: #{yolov7_head_forward.4} parent=11 // pred_region
        _
      $region16: #{yolov7_head_forward.4} parent=11 // pred_fallthru
        _
      // Predicated region
      $region17: #{yolov7_head_forward.4} parent=11 // pred_check
        %p167 = pneg %p93
      $region18: #{yolov7_head_forward.4} parent=11 // pred_check_branch
        %169 = sbr.rel (%p167) target = $region20
      $region19: #{yolov7_head_forward.4} parent=11 // pred_region
        _
      $region20: #{yolov7_head_forward.4} parent=11 // pred_fallthru
        _
    $region12: #{yolov7_head_forward.4} parent=5 // pred_fallthru
      _
    %p170 = scmp.lt.s32.totalorder %s11, 2
    // Predicated region
    $region21: #{yolov7_head_forward.4} parent=5 // pred_check
      %p171 = pneg %p170
    $region22: #{yolov7_head_forward.4} parent=5 // pred_check_branch
      %173 = sbr.rel (%p171) target = $region24
    $region23: #{yolov7_head_forward.4} parent=5 // pred_region
      // Predicated region
      $region25: #{yolov7_head_forward.4} parent=23 // pred_check
        %p174 = pneg %p45
      $region26: #{yolov7_head_forward.4} parent=23 // pred_check_branch
        %176 = sbr.rel (%p174) target = $region28
      $region27: #{yolov7_head_forward.4} parent=23 // pred_region
        %p177 = scmp.lt.s32.totalorder %s18, 1
        %s178 = scalar_select %p177, %s18, 1
        %p179 = scmp.lt.s32.totalorder %s19, 0
        %s180 = scalar_select %p179, %s19, 0
        %s181 = smul.addr %s178, 4
        %s182 = sadd.s32 %s180, %s181
        %s183 = smul.addr %s182, 8
        %s184 = scalar_lea.vmem %s0, %s183
      $region28: #{yolov7_head_forward.4} parent=23 // pred_fallthru
        _
    $region24: #{yolov7_head_forward.4} parent=5 // pred_fallthru
      _
    %p185 = scmp.le.s32.totalorder 1, %s11
    %p186 = scmp.lt.s32.totalorder %s11, 3
    %p187 = pnand %p185, %p186
    %p188 = pneg %p187
    // Predicated region
    $region29: #{yolov7_head_forward.4} parent=5 // pred_check
      _
    $region30: #{yolov7_head_forward.4} parent=5 // pred_check_branch
      %190 = sbr.rel (%p187) target = $region32
    $region31: #{yolov7_head_forward.4} parent=5 // pred_region
      %s191 = ssub.s32 %s11, 1
      %p192 = scmp.lt.s32.totalorder %s20, 1
      %s193 = scalar_select %p192, %s20, 1
      %p194 = scmp.lt.s32.totalorder %s21, 0
      %s195 = scalar_select %p194, %s21, 0
      %s196 = smul.addr %s193, 4
      %s197 = sadd.s32 %s195, %s196
      %s198 = smul.addr %s197, 8
      %s199 = scalar_lea.vmem %s0, %s198
      %p200 = pneg %p51
      %p201 = pneg %p48
      %p202 = pneg %p72
      %p203 = pneg %p69
      %p204 = pneg %p93
      %p205 = pneg %p90
      %p206 = pneg %p121
      %p207 = pneg %p118
      %p208 = scmp.lt.s32.totalorder %s20, 1
      %s209 = scalar_select %p208, %s20, 1
      %p210 = scmp.lt.s32.totalorder %s21, 0
      %s211 = scalar_select %p210, %s21, 0
      %s212 = smul.addr %s209, 3
      %s213 = sadd.s32 %s211, %s212
      %s214 = smul.addr %s213, 8
      %s215 = scalar_lea.vmem %s3, %s214
      %p216 = pneg %p149
      %p217 = pneg %p146
      %p218 = scmp.lt.s32.totalorder %s20, 1
      %s219 = scalar_select %p218, %s20, 1
      %p220 = scmp.lt.s32.totalorder %s21, 0
      %s221 = scalar_select %p220, %s21, 0
      %s222 = smul.addr %s219, 3
      %s223 = sadd.s32 %s221, %s222
      %s224 = smul.addr %s223, 8
      %s225 = scalar_lea.vmem %s4, %s224
      %p226 = scmp.lt.s32.totalorder %s20, 1
      %s227 = scalar_select %p226, %s20, 1
      %p228 = scmp.lt.s32.totalorder %s21, 0
      %s229 = scalar_select %p228, %s21, 0
      %s230 = smul.addr %s227, 4
      %s231 = sadd.s32 %s229, %s230
      %s232 = smul.addr %s231, 8
      %s233 = scalar_lea.vmem %s0, %s232
      %p234 = scmp.lt.s32.totalorder %s20, 1
      %s235 = scalar_select %p234, %s20, 1
      %p236 = scmp.lt.s32.totalorder %s21, 0
      %s237 = scalar_select %p236, %s21, 0
      %s238 = smul.addr %s235, 3
      %s239 = sadd.s32 %s237, %s238
      %s240 = smul.addr %s239, 8
      %s241 = scalar_lea.vmem %s3, %s240
      %p242 = scmp.lt.s32.totalorder %s20, 1
      %s243 = scalar_select %p242, %s20, 1
      %p244 = scmp.lt.s32.totalorder %s21, 0
      %s245 = scalar_select %p244, %s21, 0
      %s246 = smul.addr %s243, 3
      %s247 = sadd.s32 %s245, %s246
      %s248 = smul.addr %s247, 8
      %s249 = scalar_lea.vmem %s4, %s248
      %v250 = vld [vmem:[%s2] sm:$0xff]
      %v251 = vld [vmem:[%s2 + $0x8] sm:$0xff]
      %v252 = vld [vmem:[%s2 + $0x10] sm:$0xff]
      %vm253 = vcmp.gt.f32.partialorder %v250, 0.5
      %vm254 = vcmp.gt.f32.partialorder %v251, 0.5
      %vm255 = vcmp.gt.f32.partialorder %v252, 0.5
      %v256 = vld [vmem:[%s233] sm:$0xff]
      %v257 = vld [vmem:[%s233 + $0x8] sm:$0xff]
      %v258 = vld [vmem:[%s233 + $0x10] sm:$0xff]
      %v259 = vld [vmem:[%s233 + $0x18] sm:$0xff]
      %v260 = vld [vmem:[%s1] sm:$0xff]
      %v261 = vld [vmem:[%s1 + $0x8] sm:$0xff]
      %v262 = vld [vmem:[%s1 + $0x10] sm:$0xff]
      %264 = vset.pattern.permute.xlu0 0
      %265 = vperm.xlu0 %264, %v250
      %v266 = vpop.permute.xlu0 %265
      %269 = vset.pattern.permute.xlu0 0
      %270 = vperm.xlu0 %269, %v251
      %v271 = vpop.permute.xlu0 %270
      %274 = vset.pattern.permute.xlu0 0
      %275 = vperm.xlu0 %274, %v252
      %v276 = vpop.permute.xlu0 %275
      %vm278 = vcmask 261120
      %v280 = vsel %vm278, %v260, 0
      %v283 = vsel %vm278, %v261, 0
      %v286 = vsel %vm278, %v262, 0
      %288 = vmatprep.subr.mxu0 0.0
      %289 = vmatpush1.msra.mxu0 0.0
      %290 = vmatprep.subr.mxu0 0.0
      %291 = vmatpush1.msra.mxu0 0.0
      %292 = vmatprep.subr.mxu0 0.0
      %293 = vmatpush1.msra.mxu0 0.0
      %294 = vmatprep.subr.mxu0 0.0
      %295 = vmatpush1.msra.mxu0 0.0
      %296 = vmatprep.subr.mxu0 0.0
      %297 = vmatpush1.msra.mxu0 0.0
      %298 = vmatprep.subr.mxu0 0.0
      %299 = vmatpush1.msra.mxu0 0.0
      %300 = vmatprep.subr.mxu0 0.0
      %301 = vmatpush1.msra.mxu0 0.0
      %302 = vmatprep.subr.mxu0 0.0
      %303 = vmatpush1.msra.mxu0 0.0
      %304 = vmatprep.subr.mxu0 0.0
      %305 = vmatpush1.msra.mxu0 0.0
      %306 = vmatprep.subr.mxu0 0.0
      %307 = vmatpush1.msra.mxu0 0.0
      %308 = vmatprep.subr.mxu0 0.0
      %309 = vmatpush1.msra.mxu0 0.0
      %310 = vmatprep.subr.mxu0 0.0
      %311 = vmatpush1.msra.mxu0 0.0
      %312 = vmatprep.subr.mxu0 0.0
      %313 = vmatpush1.msra.mxu0 %v259
      %314 = vmatprep.subr.mxu0 0.0
      %315 = vmatpush1.msra.mxu0 %v258
      %316 = vmatprep.subr.mxu0 0.0
      %317 = vmatpush1.msra.mxu0 %v257
      %318 = vmatprep.subr.mxu0 0.0
      %319 = vmatpush1.msra.mxu0 %v256
      %320 = vmatprep.subr.mxu0 0.0
      %321 = vmatpush2.msra.mxu0 0.0
      %322 = vmatprep.subr.mxu0 0.0
      %323 = vmatpush2.msra.mxu0 0.0
      %324 = vmatprep.subr.mxu0 0.0
      %325 = vmatpush2.msra.mxu0 0.0
      %326 = vmatprep.subr.mxu0 0.0
      %327 = vmatpush2.msra.mxu0 0.0
      %328 = vmatprep.subr.mxu0 0.0
      %329 = vmatpush2.msra.mxu0 0.0
      %330 = vmatprep.subr.mxu0 0.0
      %331 = vmatpush2.msra.mxu0 0.0
      %332 = vmatprep.subr.mxu0 0.0
      %333 = vmatpush2.msra.mxu0 0.0
      %334 = vmatprep.subr.mxu0 0.0
      %335 = vmatpush2.msra.mxu0 0.0
      %336 = vmatprep.subr.mxu0 0.0
      %337 = vmatpush2.msra.mxu0 0.0
      %338 = vmatprep.subr.mxu0 0.0
      %339 = vmatpush2.msra.mxu0 0.0
      %340 = vmatprep.subr.mxu0 0.0
      %341 = vmatpush2.msra.mxu0 0.0
      %342 = vmatprep.subr.mxu0 0.0
      %343 = vmatpush2.msra.mxu0 0.0
      %344 = vmatprep.subr.mxu0 0.0
      %345 = vmatpush2.msra.mxu0 0.0
      %346 = vmatprep.subr.mxu0 0.0
      %347 = vmatpush2.msra.mxu0 0.0
      %348 = vmatprep.subr.mxu0 0.0
      %349 = vmatpush2.msra.mxu0 0.0
      %350 = vmatprep.subr.mxu0 0.0
      %351 = vmatpush2.msra.mxu0 0.0
      %352 = vmatprep.mubr.f32.mxu0 0.0
      %353 = vmatmul.mubr.f32.gmra.mxu0 %v280
      %v354 = vpop.f32.mrf.mxu0
      %v355 = vadd.f32 %v266, %v354
      %v356 = vpop.f32.mrf.mxu0
      %357 = vmatprep.mubr.f32.mxu0 0.0
      %358 = vmatmul.mubr.f32.gmra.mxu0 %v283
      %v359 = vpop.f32.mrf.mxu0
      %v360 = vadd.f32 %v271, %v359
      %v361 = vpop.f32.mrf.mxu0
      %362 = vmatprep.mubr.f32.mxu0 0.0
      %363 = vmatmul.mubr.f32.gmra.mxu0 %v286
      %v364 = vpop.f32.mrf.mxu0
      %v365 = vadd.f32 %v276, %v364
      %v366 = vpop.f32.mrf.mxu0
      %367 = vdwg.mxu0
      %v368 = vxor.u32 %v355, 2147483648
      %v369 = vxor.u32 %v360, 2147483648
      %v370 = vxor.u32 %v365, 2147483648
      %v371 = vmul.f32 %v368, 1.442695
      %v372 = vpow.pop %v371
      %v373 = vmul.f32 %v369, 1.442695
      %v374 = vpow.pop %v373
      %v375 = vmul.f32 %v370, 1.442695
      %v376 = vpow.pop %v375
      %v377 = vadd.f32 %v372, 1.0
      %v378 = vadd.f32 %v374, 1.0
      %v379 = vadd.f32 %v376, 1.0
      %v380 = vrcp.pop %v377
      %v381 = vmul.f32 1.0, %v380
      %v382 = vrcp.pop %v378
      %v383 = vmul.f32 1.0, %v382
      %v384 = vrcp.pop %v379
      %v385 = vmul.f32 1.0, %v384
      %s386 = smul.u32 %s21, 16
      %v387 = vlaneseq
      %v388 = vand.u32 %v387, 127
      %v389 = vstv %s386
      %v390 = vadd.s32 %v389, %v388
      %v391 = vcvt.s32.f32 %v390
      %v392 = vadd.f32 %v391, 0.5
      %v393 = vmul.f32 %v392, 0.25
      %v394 = vfloor.f32 %v393
      %v395 = vmul.f32 %v394, 4.0
      %v396 = vsub.f32 %v391, %v395
      %v397 = vmul.f32 %v396, 16.0
      %v398 = vsub.f32 %v397, 8.0
      %v399 = vmul.f32 %v394, 16.0
      %v400 = vsub.f32 %v399, 8.0
      %401 = vset.pattern.permute.xlu0 3
      %402 = vperm.xlu0 %401, %v250
      %v403 = vpop.permute.xlu0 %402
      %405 = vset.pattern.permute.xlu0 3
      %406 = vperm.xlu0 %405, %v251
      %v407 = vpop.permute.xlu0 %406
      %409 = vset.pattern.permute.xlu0 3
      %410 = vperm.xlu0 %409, %v252
      %v411 = vpop.permute.xlu0 %410
      %v413 = vmul.f32 %v403, %v398
      %v414 = vmul.f32 %v407, %v398
      %v415 = vmul.f32 %v411, %v398
      %416 = vset.pattern.permute.xlu0 4
      %417 = vperm.xlu0 %416, %v250
      %v418 = vpop.permute.xlu0 %417
      %420 = vset.pattern.permute.xlu0 4
      %421 = vperm.xlu0 %420, %v251
      %v422 = vpop.permute.xlu0 %421
      %424 = vset.pattern.permute.xlu0 4
      %425 = vperm.xlu0 %424, %v252
      %v426 = vpop.permute.xlu0 %425
      %v428 = vmul.f32 %v418, %v400
      %v429 = vmul.f32 %v422, %v400
      %v430 = vmul.f32 %v426, %v400
      %v431 = vadd.f32 %v413, %v428
      %v432 = vadd.f32 %v414, %v429
      %v433 = vadd.f32 %v415, %v430
      %434 = vset.pattern.permute.xlu0 2
      %435 = vperm.xlu0 %434, %v250
      %v436 = vpop.permute.xlu0 %435
      %438 = vset.pattern.permute.xlu0 2
      %439 = vperm.xlu0 %438, %v251
      %v440 = vpop.permute.xlu0 %439
      %442 = vset.pattern.permute.xlu0 2
      %443 = vperm.xlu0 %442, %v252
      %v444 = vpop.permute.xlu0 %443
      %v446 = vmul.f32 %v436, %v381
      %v447 = vmul.f32 %v440, %v383
      %v448 = vmul.f32 %v444, %v385
      %v449 = vmul.f32 %v446, %v381
      %v450 = vmul.f32 %v447, %v383
      %v451 = vmul.f32 %v448, %v385
      %452 = vset.pattern.permute.xlu0 1
      %453 = vperm.xlu0 %452, %v250
      %v454 = vpop.permute.xlu0 %453
      %456 = vset.pattern.permute.xlu0 1
      %457 = vperm.xlu0 %456, %v251
      %v458 = vpop.permute.xlu0 %457
      %460 = vset.pattern.permute.xlu0 1
      %461 = vperm.xlu0 %460, %v252
      %v462 = vpop.permute.xlu0 %461
      %v464 = vmul.f32 %v454, %v381
      %v465 = vmul.f32 %v458, %v383
      %v466 = vmul.f32 %v462, %v385
      %v467 = vadd.f32 %v464, %v431
      %v468 = vadd.f32 %v465, %v432
      %v469 = vadd.f32 %v466, %v433
      %v470 = vsel %vm253, 1, 0
      %v471 = vsel %vm254, 1, 0
      %v472 = vsel %vm255, 1, 0
      %473 = vset.pattern.permute.xlu0 5
      %474 = vperm.xlu0 %473, %v470
      %v475 = vpop.permute.xlu0 %474
      %476 = vset.pattern.permute.xlu0 5
      %477 = vperm.xlu0 %476, %v471
      %v478 = vpop.permute.xlu0 %477
      %479 = vset.pattern.permute.xlu0 5
      %480 = vperm.xlu0 %479, %v472
      %v481 = vpop.permute.xlu0 %480
      %vm482 = vcmp.eq.s32.totalorder %v475, 1
      %vm483 = vcmp.eq.s32.totalorder %v478, 1
      %vm484 = vcmp.eq.s32.totalorder %v481, 1
      %v485 = vsel %vm482, %v449, %v467
      %v486 = vsel %vm483, %v450, %v468
      %v487 = vsel %vm484, %v451, %v469
      %vm488 = vcmask 130048
      %489 = vst.msk [vmem:[%s241] sm:$0xff] %vm488, %v355
      %490 = vst.msk [vmem:[%s241 + $0x8] sm:$0xff] %vm488, %v360
      %491 = vst.msk [vmem:[%s241 + $0x10] sm:$0xff] %vm488, %v365
      %492 = vst.msk [vmem:[%s249] sm:$0xff] %vm488, %v485
      %493 = vst.msk [vmem:[%s249 + $0x8] sm:$0xff] %vm488, %v486
      %494 = vst.msk [vmem:[%s249 + $0x10] sm:$0xff] %vm488, %v487
      %p495 = scmp.lt.s32.totalorder %s20, 1
      %s496 = scalar_select %p495, %s20, 1
      %p497 = scmp.lt.s32.totalorder %s21, 0
      %s498 = scalar_select %p497, %s21, 0
      %s499 = smul.addr %s496, 3
      %s500 = sadd.s32 %s498, %s499
      %s501 = smul.addr %s500, 8
      %s502 = scalar_lea.vmem %s3, %s501
      %p503 = scmp.lt.s32.totalorder %s20, 1
      %s504 = scalar_select %p503, %s20, 1
      %p505 = scmp.lt.s32.totalorder %s21, 0
      %s506 = scalar_select %p505, %s21, 0
      %s507 = smul.addr %s504, 3
      %s508 = sadd.s32 %s506, %s507
      %s509 = smul.addr %s508, 8
      %s510 = scalar_lea.vmem %s4, %s509
      // Predicated region
      $region33: #{yolov7_head_forward.4} parent=31 // pred_check
        %p511 = pneg %p118
      $region34: #{yolov7_head_forward.4} parent=31 // pred_check_branch
        %513 = sbr.rel (%p511) target = $region36
      $region35: #{yolov7_head_forward.4} parent=31 // pred_region
        _
      $region36: #{yolov7_head_forward.4} parent=31 // pred_fallthru
        _
      // Predicated region
      $region37: #{yolov7_head_forward.4} parent=31 // pred_check
        %p514 = pneg %p146
      $region38: #{yolov7_head_forward.4} parent=31 // pred_check_branch
        %516 = sbr.rel (%p514) target = $region40
      $region39: #{yolov7_head_forward.4} parent=31 // pred_region
        _
      $region40: #{yolov7_head_forward.4} parent=31 // pred_fallthru
        _
    $region32: #{yolov7_head_forward.4} parent=5 // pred_fallthru
      _
    %p517 = scmp.le.s32.totalorder 2, %s11
    // Predicated region
    $region41: #{yolov7_head_forward.4} parent=5 // pred_check
      %p518 = pneg %p517
    $region42: #{yolov7_head_forward.4} parent=5 // pred_check_branch
      %520 = sbr.rel (%p518) target = $region44
    $region43: #{yolov7_head_forward.4} parent=5 // pred_region
      %s521 = ssub.s32 %s11, 2
      // Predicated region
      $region45: #{yolov7_head_forward.4} parent=43 // pred_check
        %p522 = pneg %p124
      $region46: #{yolov7_head_forward.4} parent=43 // pred_check_branch
        %524 = sbr.rel (%p522) target = $region48
      $region47: #{yolov7_head_forward.4} parent=43 // pred_region
        %p525 = scmp.lt.s32.totalorder %s22, 1
        %s526 = scalar_select %p525, %s22, 1
        %p527 = scmp.lt.s32.totalorder %s23, 0
        %s528 = scalar_select %p527, %s23, 0
        %s529 = smul.addr %s526, 3
        %s530 = sadd.s32 %s528, %s529
        %s531 = smul.addr %s530, 8
        %s532 = scalar_lea.vmem %s3, %s531
      $region48: #{yolov7_head_forward.4} parent=43 // pred_fallthru
        _
      // Predicated region
      $region49: #{yolov7_head_forward.4} parent=43 // pred_check
        %p533 = pneg %p152
      $region50: #{yolov7_head_forward.4} parent=43 // pred_check_branch
        %535 = sbr.rel (%p533) target = $region52
      $region51: #{yolov7_head_forward.4} parent=43 // pred_region
        %p536 = scmp.lt.s32.totalorder %s22, 1
        %s537 = scalar_select %p536, %s22, 1
        %p538 = scmp.lt.s32.totalorder %s23, 0
        %s539 = scalar_select %p538, %s23, 0
        %s540 = smul.addr %s537, 3
        %s541 = sadd.s32 %s539, %s540
        %s542 = smul.addr %s541, 8
        %s543 = scalar_lea.vmem %s4, %s542
      $region52: #{yolov7_head_forward.4} parent=43 // pred_fallthru
        _
    $region44: #{yolov7_head_forward.4} parent=5 // pred_fallthru
      _
  $region6: #{yolov7_head_forward.4} parent=0 // loop_footer
    %s15 = sadd.s32 1, %s11
  $region7: #{yolov7_head_forward.4} parent=0 // loop_footer_branch
    %10 = sbr.rel target = $region3
  $region8: #{yolov7_head_forward.4} parent=0 // loop_exit
    _

// kernel: yolov7_head_forward.3
$region0: #{yolov7_head_forward.3}
  #allocation0 [shape = 'u32[]', space=smem, size = 0x4, offset = 0x4, fixed_abs, tag = 'smem constant byte address 0x4 - core index']
  #allocation1 [shape = 'u32[144,128]{1,0:T(1,128)}', space=vmem, size = 0x12000, scoped, tag = 'internal scratch']
  %s0 = inlined_call_operand.vmem [shape: f32[2,16,64], index: 0, kind: input, shape index: {}]
  %s1 = inlined_call_operand.vmem [shape: f32[24,16], index: 1, kind: input, shape index: {}]
  %s2 = inlined_call_operand.vmem [shape: f32[24,6], index: 2, kind: input, shape index: {}]
  %s3 = inlined_call_operand.vmem [shape: f32[2,24,64], index: 3, kind: output, shape index: {0}]
  %s4 = inlined_call_operand.vmem [shape: f32[2,24,64], index: 4, kind: output, shape index: {1}]
  %5 = xla_tuple %s3, %s4
  %s6 = sld [smem:[#allocation0]]
  $region53: #{yolov7_head_forward.3} parent=0
    _
  %s8 = ssub.s32 1, %s6
  %s9 = scalar_select 0, %s8, %s6
  loop: start=0, step=1, limit=4
  $region2: #{yolov7_head_forward.3} parent=0 // loop_pre_header
    _
  $region3: #{yolov7_head_forward.3} parent=0 // loop_header
    %s11 = sphi 0, %s15
    %p12 = scmp.ge.s32.totalorder %s11, 4
    %s18 = sphi 0, %s30
    %s19 = sphi 0, %s26
    %s20 = sphi 0, %s18
    %s21 = sphi 0, %s19
    %s22 = sphi 0, %s20
    %s23 = sphi 0, %s21
    %s35 = sphi 0, %s37
    %s38 = sphi 0, %s35
    %s39 = sphi 0, %s38
    %s55 = sphi 0, %s39
    %s59 = sphi 0, %s59
    %s61 = sphi 0, %s59
    %s62 = sphi 0, %s61
    %s76 = sphi 0, %s62
    %s80 = sphi 0, %s80
    %s82 = sphi 0, %s80
    %s83 = sphi 0, %s82
    %s97 = sphi 0, %s83
    %s105 = sphi 0, %s107
    %s108 = sphi 0, %s105
    %s109 = sphi 0, %s108
    %s125 = sphi 0, %s109
    %s133 = sphi 0, %s135
    %s136 = sphi 0, %s133
    %s137 = sphi 0, %s136
    %s153 = sphi 0, %s137
  $region4: #{yolov7_head_forward.3} parent=0 // loop_header_branch
    %14 = sbr.rel (%p12) target = $region8
  $region5: #{yolov7_head_forward.3} parent=0 // loop_body
    %s16 = ssub.s32 %s11, 1
    %s17 = ssub.s32 %s11, 2
    %s24 = sadd.s32 1, %s19
    %p25 = scmp.ge.s32.totalorder %s24, 1
    %s26 = scalar_select %p25, 0, %s24
    %s27 = sadd.s32 1, %s18
    %s28 = scalar_select %p25, %s27, %s18
    %p29 = scmp.ge.s32.totalorder %s28, 2
    %s30 = scalar_select %p29, 0, %s28
    %s31 = ssub.s32 %s18, %s30
    %s32 = ssub.s32 %s19, %s26
    %s33 = sor.u32 %s31, %s32
    %p34 = scmp.eq.s32.totalorder %s33, 0
    %s36 = sadd.s32 %s35, 1
    %s37 = scalar_select %p34, %s35, %s36
    %p40 = pneg %p34
    %p41 = scmp.eq.s32.totalorder %s11, 1
    %p42 = por %p40, %p41
    %p43 = scmp.ne.s32.totalorder %s35, %s38
    %p44 = scmp.eq.s32.totalorder %s11, 0
    %p45 = por %p43, %p44
    %p46 = scmp.ne.s32.totalorder %s35, %s38
    %p47 = scmp.eq.s32.totalorder %s16, 1
    %p48 = por %p46, %p47
    %p49 = scmp.ne.s32.totalorder %s38, %s39
    %p50 = scmp.eq.s32.totalorder %s16, 0
    %p51 = por %p49, %p50
    %p52 = scmp.ne.s32.totalorder %s38, %s39
    %p53 = scmp.eq.s32.totalorder %s17, 1
    %p54 = por %p52, %p53
    %p56 = scmp.ne.s32.totalorder %s39, %s55
    %p57 = scmp.eq.s32.totalorder %s17, 0
    %p58 = por %p56, %p57
    %s60 = sadd.s32 %s59, 1
    %p63 = scmp.eq.s32.totalorder %s11, 1
    %p64 = scmp.ne.s32.totalorder %s59, %s61
    %p65 = scmp.eq.s32.totalorder %s11, 0
    %p66 = por %p64, %p65
    %p67 = scmp.ne.s32.totalorder %s59, %s61
    %p68 = scmp.eq.s32.totalorder %s16, 1
    %p69 = por %p67, %p68
    %p70 = scmp.ne.s32.totalorder %s61, %s62
    %p71 = scmp.eq.s32.totalorder %s16, 0
    %p72 = por %p70, %p71
    %p73 = scmp.ne.s32.totalorder %s61, %s62
    %p74 = scmp.eq.s32.totalorder %s17, 1
    %p75 = por %p73, %p74
    %p77 = scmp.ne.s32.totalorder %s62, %s76
    %p78 = scmp.eq.s32.totalorder %s17, 0
    %p79 = por %p77, %p78
    %s81 = sadd.s32 %s80, 1
    %p84 = scmp.eq.s32.totalorder %s11, 1
    %p85 = scmp.ne.s32.totalorder %s80, %s82
    %p86 = scmp.eq.s32.totalorder %s11, 0
    %p87 = por %p85, %p86
    %p88 = scmp.ne.s32.totalorder %s80, %s82
    %p89 = scmp.eq.s32.totalorder %s16, 1
    %p90 = por %p88, %p89
    %p91 = scmp.ne.s32.totalorder %s82, %s83
    %p92 = scmp.eq.s32.totalorder %s16, 0
    %p93 = por %p91, %p92
    %p94 = scmp.ne.s32.totalorder %s82, %s83
    %p95 = scmp.eq.s32.totalorder %s17, 1
    %p96 = por %p94, %p95
    %p98 = scmp.ne.s32.totalorder %s83, %s97
    %p99 = scmp.eq.s32.totalorder %s17, 0
    %p100 = por %p98, %p99
    %s101 = ssub.s32 %s18, %s30
    %s102 = ssub.s32 %s19, %s26
    %s103 = sor.u32 %s101, %s102
    %p104 = scmp.eq.s32.totalorder %s103, 0
    %s106 = sadd.s32 %s105, 1
    %s107 = scalar_select %p104, %s105, %s106
    %p110 = pneg %p104
    %p111 = scmp.eq.s32.totalorder %s11, 1
    %p112 = por %p110, %p111
    %p113 = scmp.ne.s32.totalorder %s105, %s108
    %p114 = scmp.eq.s32.totalorder %s11, 0
    %p115 = por %p113, %p114
    %p116 = scmp.ne.s32.totalorder %s105, %s108
    %p117 = scmp.eq.s32.totalorder %s16, 1
    %p118 = por %p116, %p117
    %p119 = scmp.ne.s32.totalorder %s108, %s109
    %p120 = scmp.eq.s32.totalorder %s16, 0
    %p121 = por %p119, %p120
    %p122 = scmp.ne.s32.totalorder %s108, %s109
    %p123 = scmp.eq.s32.totalorder %s17, 1
    %p124 = por %p122, %p123
    %p126 = scmp.ne.s32.totalorder %s109, %s125
    %p127 = scmp.eq.s32.totalorder %s17, 0
    %p128 = por %p126, %p127
    %s129 = ssub.s32 %s18, %s30
    %s130 = ssub.s32 %s19, %s26
    %s131 = sor.u32 %s129, %s130
    %p132 = scmp.eq.s32.totalorder %s131, 0
    %s134 = sadd.s32 %s133, 1
    %s135 = scalar_select %p132, %s133, %s134
    %p138 = pneg %p132
    %p139 = scmp.eq.s32.totalorder %s11, 1
    %p140 = por %p138, %p139
    %p141 = scmp.ne.s32.totalorder %s133, %s136
    %p142 = scmp.eq.s32.totalorder %s11, 0
    %p143 = por %p141, %p142
    %p144 = scmp.ne.s32.totalorder %s133, %s136
    %p145 = scmp.eq.s32.totalorder %s16, 1
    %p146 = por %p144, %p145
    %p147 = scmp.ne.s32.totalorder %s136, %s137
    %p148 = scmp.eq.s32.totalorder %s16, 0
    %p149 = por %p147, %p148
    %p150 = scmp.ne.s32.totalorder %s136, %s137
    %p151 = scmp.eq.s32.totalorder %s17, 1
    %p152 = por %p150, %p151
    %p154 = scmp.ne.s32.totalorder %s137, %s153
    %p155 = scmp.eq.s32.totalorder %s17, 0
    %p156 = por %p154, %p155
    %p157 = scmp.le.s32.totalorder 1, %s11
    %p158 = scmp.lt.s32.totalorder %s11, 3
    %p159 = pnand %p157, %p158
    %p160 = pneg %p159
    // Predicated region
    $region9: #{yolov7_head_forward.3} parent=5 // pred_check
      _
    $region10: #{yolov7_head_forward.3} parent=5 // pred_check_branch
      %162 = sbr.rel (%p159) target = $region12
    $region11: #{yolov7_head_forward.3} parent=5 // pred_region
      %s163 = ssub.s32 %s11, 1
      // Predicated region
      $region13: #{yolov7_head_forward.3} parent=11 // pred_check
        %p164 = pneg %p72
      $region14: #{yolov7_head_forward.3} parent=11 // pred_check_branch
        %166 = sbr.rel (%p164) target = $region16
      $region15: #{yolov7_head_forward.3} parent=11 // pred_region
        _
      $region16: #{yolov7_head_forward.3} parent=11 // pred_fallthru
        _
      // Predicated region
      $region17: #{yolov7_head_forward.3} parent=11 // pred_check
        %p167 = pneg %p93
      $region18: #{yolov7_head_forward.3} parent=11 // pred_check_branch
        %169 = sbr.rel (%p167) target = $region20
      $region19: #{yolov7_head_forward.3} parent=11 // pred_region
        _
      $region20: #{yolov7_head_forward.3} parent=11 // pred_fallthru
        _
    $region12: #{yolov7_head_forward.3} parent=5 // pred_fallthru
      _
    %p170 = scmp.lt.s32.totalorder %s11, 2
    // Predicated region
    $region21: #{yolov7_head_forward.3} parent=5 // pred_check
      %p171 = pneg %p170
    $region22: #{yolov7_head_forward.3} parent=5 // pred_check_branch
      %173 = sbr.rel (%p171) target = $region24
    $region23: #{yolov7_head_forward.3} parent=5 // pred_region
      // Predicated region
      $region25: #{yolov7_head_forward.3} parent=23 // pred_check
        %p174 = pneg %p45
      $region26: #{yolov7_head_forward.3} parent=23 // pred_check_branch
        %176 = sbr.rel (%p174) target = $region28
      $region27: #{yolov7_head_forward.3} parent=23 // pred_region
        %p177 = scmp.lt.s32.totalorder %s18, 1
        %s178 = scalar_select %p177, %s18, 1
        %p179 = scmp.lt.s32.totalorder %s19, 0
        %s180 = scalar_select %p179, %s19, 0
        %s181 = smul.addr %s178, 2
        %s182 = sadd.s32 %s180, %s181
        %s183 = smul.addr %s182, 8
        %s184 = scalar_lea.vmem %s0, %s183
      $region28: #{yolov7_head_forward.3} parent=23 // pred_fallthru
        _
    $region24: #{yolov7_head_forward.3} parent=5 // pred_fallthru
      _
    %p185 = scmp.le.s32.totalorder 1, %s11
    %p186 = scmp.lt.s32.totalorder %s11, 3
    %p187 = pnand %p185, %p186
    %p188 = pneg %p187
    // Predicated region
    $region29: #{yolov7_head_forward.3} parent=5 // pred_check
      _
    $region30: #{yolov7_head_forward.3} parent=5 // pred_check_branch
      %190 = sbr.rel (%p187) target = $region32
    $region31: #{yolov7_head_forward.3} parent=5 // pred_region
      %s191 = ssub.s32 %s11, 1
      %p192 = scmp.lt.s32.totalorder %s20, 1
      %s193 = scalar_select %p192, %s20, 1
      %p194 = scmp.lt.s32.totalorder %s21, 0
      %s195 = scalar_select %p194, %s21, 0
      %s196 = smul.addr %s193, 2
      %s197 = sadd.s32 %s195, %s196
      %s198 = smul.addr %s197, 8
      %s199 = scalar_lea.vmem %s0, %s198
      %p200 = pneg %p51
      %p201 = pneg %p48
      %p202 = pneg %p72
      %p203 = pneg %p69
      %p204 = pneg %p93
      %p205 = pneg %p90
      %p206 = pneg %p121
      %p207 = pneg %p118
      %p208 = scmp.lt.s32.totalorder %s20, 1
      %s209 = scalar_select %p208, %s20, 1
      %p210 = scmp.lt.s32.totalorder %s21, 0
      %s211 = scalar_select %p210, %s21, 0
      %s212 = smul.addr %s209, 3
      %s213 = sadd.s32 %s211, %s212
      %s214 = smul.addr %s213, 8
      %s215 = scalar_lea.vmem %s3, %s214
      %p216 = pneg %p149
      %p217 = pneg %p146
      %p218 = scmp.lt.s32.totalorder %s20, 1
      %s219 = scalar_select %p218, %s20, 1
      %p220 = scmp.lt.s32.totalorder %s21, 0
      %s221 = scalar_select %p220, %s21, 0
      %s222 = smul.addr %s219, 3
      %s223 = sadd.s32 %s221, %s222
      %s224 = smul.addr %s223, 8
      %s225 = scalar_lea.vmem %s4, %s224
      %p226 = scmp.lt.s32.totalorder %s20, 1
      %s227 = scalar_select %p226, %s20, 1
      %p228 = scmp.lt.s32.totalorder %s21, 0
      %s229 = scalar_select %p228, %s21, 0
      %s230 = smul.addr %s227, 2
      %s231 = sadd.s32 %s229, %s230
      %s232 = smul.addr %s231, 8
      %s233 = scalar_lea.vmem %s0, %s232
      %p234 = scmp.lt.s32.totalorder %s20, 1
      %s235 = scalar_select %p234, %s20, 1
      %p236 = scmp.lt.s32.totalorder %s21, 0
      %s237 = scalar_select %p236, %s21, 0
      %s238 = smul.addr %s235, 3
      %s239 = sadd.s32 %s237, %s238
      %s240 = smul.addr %s239, 8
      %s241 = scalar_lea.vmem %s3, %s240
      %p242 = scmp.lt.s32.totalorder %s20, 1
      %s243 = scalar_select %p242, %s20, 1
      %p244 = scmp.lt.s32.totalorder %s21, 0
      %s245 = scalar_select %p244, %s21, 0
      %s246 = smul.addr %s243, 3
      %s247 = sadd.s32 %s245, %s246
      %s248 = smul.addr %s247, 8
      %s249 = scalar_lea.vmem %s4, %s248
      %v250 = vld [vmem:[%s2] sm:$0xff]
      %v251 = vld [vmem:[%s2 + $0x8] sm:$0xff]
      %v252 = vld [vmem:[%s2 + $0x10] sm:$0xff]
      %vm253 = vcmp.gt.f32.partialorder %v250, 0.5
      %vm254 = vcmp.gt.f32.partialorder %v251, 0.5
      %vm255 = vcmp.gt.f32.partialorder %v252, 0.5
      %v256 = vld [vmem:[%s233] sm:$0xff]
      %v257 = vld [vmem:[%s233 + $0x8] sm:$0xff]
      %v258 = vld [vmem:[%s1] sm:$0xff]
      %v259 = vld [vmem:[%s1 + $0x8] sm:$0xff]
      %v260 = vld [vmem:[%s1 + $0x10] sm:$0xff]
      %262 = vset.pattern.permute.xlu0 0
      %263 = vperm.xlu0 %262, %v250
      %v264 = vpop.permute.xlu0 %263
      %267 = vset.pattern.permute.xlu0 0
      %268 = vperm.xlu0 %267, %v251
      %v269 = vpop.permute.xlu0 %268
      %272 = vset.pattern.permute.xlu0 0
      %273 = vperm.xlu0 %272, %v252
      %v274 = vpop.permute.xlu0 %273
      %vm276 = vcmask 130048
      %v278 = vsel %vm276, %v258, 0
      %v281 = vsel %vm276, %v259, 0
      %v284 = vsel %vm276, %v260, 0
      %286 = vmatprep.subr.mxu0 0.0
      %287 = vmatpush1.msra.mxu0 0.0
      %288 = vmatprep.subr.mxu0 0.0
      %289 = vmatpush1.msra.mxu0 0.0
      %290 = vmatprep.subr.mxu0 0.0
      %291 = vmatpush1.msra.mxu0 0.0
      %292 = vmatprep.subr.mxu0 0.0
      %293 = vmatpush1.msra.mxu0 0.0
      %294 = vmatprep.subr.mxu0 0.0
      %295 = vmatpush1.msra.mxu0 0.0
      %296 = vmatprep.subr.mxu0 0.0
      %297 = vmatpush1.msra.mxu0 0.0
      %298 = vmatprep.subr.mxu0 0.0
      %299 = vmatpush1.msra.mxu0 0.0
      %300 = vmatprep.subr.mxu0 0.0
      %301 = vmatpush1.msra.mxu0 0.0
      %302 = vmatprep.subr.mxu0 0.0
      %303 = vmatpush1.msra.mxu0 0.0
      %304 = vmatprep.subr.mxu0 0.0
      %305 = vmatpush1.msra.mxu0 0.0
      %306 = vmatprep.subr.mxu0 0.0
      %307 = vmatpush1.msra.mxu0 0.0
      %308 = vmatprep.subr.mxu0 0.0
      %309 = vmatpush1.msra.mxu0 0.0
      %310 = vmatprep.subr.mxu0 0.0
      %311 = vmatpush1.msra.mxu0 0.0
      %312 = vmatprep.subr.mxu0 0.0
      %313 = vmatpush1.msra.mxu0 0.0
      %314 = vmatprep.subr.mxu0 0.0
      %315 = vmatpush1.msra.mxu0 %v257
      %316 = vmatprep.subr.mxu0 0.0
      %317 = vmatpush1.msra.mxu0 %v256
      %318 = vmatprep.subr.mxu0 0.0
      %319 = vmatpush2.msra.mxu0 0.0
      %320 = vmatprep.subr.mxu0 0.0
      %321 = vmatpush2.msra.mxu0 0.0
      %322 = vmatprep.subr.mxu0 0.0
      %323 = vmatpush2.msra.mxu0 0.0
      %324 = vmatprep.subr.mxu0 0.0
      %325 = vmatpush2.msra.mxu0 0.0
      %326 = vmatprep.subr.mxu0 0.0
      %327 = vmatpush2.msra.mxu0 0.0
      %328 = vmatprep.subr.mxu0 0.0
      %329 = vmatpush2.msra.mxu0 0.0
      %330 = vmatprep.subr.mxu0 0.0
      %331 = vmatpush2.msra.mxu0 0.0
      %332 = vmatprep.subr.mxu0 0.0
      %333 = vmatpush2.msra.mxu0 0.0
      %334 = vmatprep.subr.mxu0 0.0
      %335 = vmatpush2.msra.mxu0 0.0
      %336 = vmatprep.subr.mxu0 0.0
      %337 = vmatpush2.msra.mxu0 0.0
      %338 = vmatprep.subr.mxu0 0.0
      %339 = vmatpush2.msra.mxu0 0.0
      %340 = vmatprep.subr.mxu0 0.0
      %341 = vmatpush2.msra.mxu0 0.0
      %342 = vmatprep.subr.mxu0 0.0
      %343 = vmatpush2.msra.mxu0 0.0
      %344 = vmatprep.subr.mxu0 0.0
      %345 = vmatpush2.msra.mxu0 0.0
      %346 = vmatprep.subr.mxu0 0.0
      %347 = vmatpush2.msra.mxu0 0.0
      %348 = vmatprep.subr.mxu0 0.0
      %349 = vmatpush2.msra.mxu0 0.0
      %350 = vmatprep.mubr.f32.mxu0 0.0
      %351 = vmatmul.mubr.f32.gmra.mxu0 %v278
      %v352 = vpop.f32.mrf.mxu0
      %v353 = vadd.f32 %v264, %v352
      %v354 = vpop.f32.mrf.mxu0
      %355 = vmatprep.mubr.f32.mxu0 0.0
      %356 = vmatmul.mubr.f32.gmra.mxu0 %v281
      %v357 = vpop.f32.mrf.mxu0
      %v358 = vadd.f32 %v269, %v357
      %v359 = vpop.f32.mrf.mxu0
      %360 = vmatprep.mubr.f32.mxu0 0.0
      %361 = vmatmul.mubr.f32.gmra.mxu0 %v284
      %v362 = vpop.f32.mrf.mxu0
      %v363 = vadd.f32 %v274, %v362
      %v364 = vpop.f32.mrf.mxu0
      %365 = vdwg.mxu0
      %v366 = vxor.u32 %v353, 2147483648
      %v367 = vxor.u32 %v358, 2147483648
      %v368 = vxor.u32 %v363, 2147483648
      %v369 = vmul.f32 %v366, 1.442695
      %v370 = vpow.pop %v369
      %v371 = vmul.f32 %v367, 1.442695
      %v372 = vpow.pop %v371
      %v373 = vmul.f32 %v368, 1.442695
      %v374 = vpow.pop %v373
      %v375 = vadd.f32 %v370, 1.0
      %v376 = vadd.f32 %v372, 1.0
      %v377 = vadd.f32 %v374, 1.0
      %v378 = vrcp.pop %v375
      %v379 = vmul.f32 1.0, %v378
      %v380 = vrcp.pop %v376
      %v381 = vmul.f32 1.0, %v380
      %v382 = vrcp.pop %v377
      %v383 = vmul.f32 1.0, %v382
      %s384 = smul.u32 %s21, 64
      %v385 = vlaneseq
      %v386 = vand.u32 %v385, 127
      %v387 = vstv %s384
      %v388 = vadd.s32 %v387, %v386
      %v389 = vcvt.s32.f32 %v388
      %v390 = vadd.f32 %v389, 0.5
      %v391 = vmul.f32 %v390, 0.125
      %v392 = vfloor.f32 %v391
      %v393 = vmul.f32 %v392, 8.0
      %v394 = vsub.f32 %v389, %v393
      %v395 = vmul.f32 %v394, 8.0
      %v396 = vsub.f32 %v395, 4.0
      %v397 = vsub.f32 %v393, 4.0
      %398 = vset.pattern.permute.xlu0 3
      %399 = vperm.xlu0 %398, %v250
      %v400 = vpop.permute.xlu0 %399
      %402 = vset.pattern.permute.xlu0 3
      %403 = vperm.xlu0 %402, %v251
      %v404 = vpop.permute.xlu0 %403
      %406 = vset.pattern.permute.xlu0 3
      %407 = vperm.xlu0 %406, %v252
      %v408 = vpop.permute.xlu0 %407
      %v410 = vmul.f32 %v400, %v396
      %v411 = vmul.f32 %v404, %v396
      %v412 = vmul.f32 %v408, %v396
      %413 = vset.pattern.permute.xlu0 4
      %414 = vperm.xlu0 %413, %v250
      %v415 = vpop.permute.xlu0 %414
      %417 = vset.pattern.permute.xlu0 4
      %418 = vperm.xlu0 %417, %v251
      %v419 = vpop.permute.xlu0 %418
      %421 = vset.pattern.permute.xlu0 4
      %422 = vperm.xlu0 %421, %v252
      %v423 = vpop.permute.xlu0 %422
      %v425 = vmul.f32 %v415, %v397
      %v426 = vmul.f32 %v419, %v397
      %v427 = vmul.f32 %v423, %v397
      %v428 = vadd.f32 %v410, %v425
      %v429 = vadd.f32 %v411, %v426
      %v430 = vadd.f32 %v412, %v427
      %431 = vset.pattern.permute.xlu0 2
      %432 = vperm.xlu0 %431, %v250
      %v433 = vpop.permute.xlu0 %432
      %435 = vset.pattern.permute.xlu0 2
      %436 = vperm.xlu0 %435, %v251
      %v437 = vpop.permute.xlu0 %436
      %439 = vset.pattern.permute.xlu0 2
      %440 = vperm.xlu0 %439, %v252
      %v441 = vpop.permute.xlu0 %440
      %v443 = vmul.f32 %v433, %v379
      %v444 = vmul.f32 %v437, %v381
      %v445 = vmul.f32 %v441, %v383
      %v446 = vmul.f32 %v443, %v379
      %v447 = vmul.f32 %v444, %v381
      %v448 = vmul.f32 %v445, %v383
      %449 = vset.pattern.permute.xlu0 1
      %450 = vperm.xlu0 %449, %v250
      %v451 = vpop.permute.xlu0 %450
      %453 = vset.pattern.permute.xlu0 1
      %454 = vperm.xlu0 %453, %v251
      %v455 = vpop.permute.xlu0 %454
      %457 = vset.pattern.permute.xlu0 1
      %458 = vperm.xlu0 %457, %v252
      %v459 = vpop.permute.xlu0 %458
      %v461 = vmul.f32 %v451, %v379
      %v462 = vmul.f32 %v455, %v381
      %v463 = vmul.f32 %v459, %v383
      %v464 = vadd.f32 %v461, %v428
      %v465 = vadd.f32 %v462, %v429
      %v466 = vadd.f32 %v463, %v430
      %v467 = vsel %vm253, 1, 0
      %v468 = vsel %vm254, 1, 0
      %v469 = vsel %vm255, 1, 0
      %470 = vset.pattern.permute.xlu0 5
      %471 = vperm.xlu0 %470, %v467
      %v472 = vpop.permute.xlu0 %471
      %473 = vset.pattern.permute.xlu0 5
      %474 = vperm.xlu0 %473, %v468
      %v475 = vpop.permute.xlu0 %474
      %476 = vset.pattern.permute.xlu0 5
      %477 = vperm.xlu0 %476, %v469
      %v478 = vpop.permute.xlu0 %477
      %vm479 = vcmp.eq.s32.totalorder %v472, 1
      %vm480 = vcmp.eq.s32.totalorder %v475, 1
      %vm481 = vcmp.eq.s32.totalorder %v478, 1
      %v482 = vsel %vm479, %v446, %v464
      %v483 = vsel %vm480, %v447, %v465
      %v484 = vsel %vm481, %v448, %v466
      %vm485 = vcmask 523264
      %486 = vst.msk [vmem:[%s241] sm:$0xff] %vm485, %v353
      %487 = vst.msk [vmem:[%s241 + $0x8] sm:$0xff] %vm485, %v358
      %488 = vst.msk [vmem:[%s241 + $0x10] sm:$0xff] %vm485, %v363
      %489 = vst.msk [vmem:[%s249] sm:$0xff] %vm485, %v482
      %490 = vst.msk [vmem:[%s249 + $0x8] sm:$0xff] %vm485, %v483
      %491 = vst.msk [vmem:[%s249 + $0x10] sm:$0xff] %vm485, %v484
      %p492 = scmp.lt.s32.totalorder %s20, 1
      %s493 = scalar_select %p492, %s20, 1
      %p494 = scmp.lt.s32.totalorder %s21, 0
      %s495 = scalar_select %p494, %s21, 0
      %s496 = smul.addr %s493, 3
      %s497 = sadd.s32 %s495, %s496
      %s498 = smul.addr %s497, 8
      %s499 = scalar_lea.vmem %s3, %s498
      %p500 = scmp.lt.s32.totalorder %s20, 1
      %s501 = scalar_select %p500, %s20, 1
      %p502 = scmp.lt.s32.totalorder %s21, 0
      %s503 = scalar_select %p502, %s21, 0
      %s504 = smul.addr %s501, 3
      %s505 = sadd.s32 %s503, %s504
      %s506 = smul.addr %s505, 8
      %s507 = scalar_lea.vmem %s4, %s506
      // Predicated region
      $region33: #{yolov7_head_forward.3} parent=31 // pred_check
        %p508 = pneg %p118
      $region34: #{yolov7_head_forward.3} parent=31 // pred_check_branch
        %510 = sbr.rel (%p508) target = $region36
      $region35: #{yolov7_head_forward.3} parent=31 // pred_region
        _
      $region36: #{yolov7_head_forward.3} parent=31 // pred_fallthru
        _
      // Predicated region
      $region37: #{yolov7_head_forward.3} parent=31 // pred_check
        %p511 = pneg %p146
      $region38: #{yolov7_head_forward.3} parent=31 // pred_check_branch
        %513 = sbr.rel (%p511) target = $region40
      $region39: #{yolov7_head_forward.3} parent=31 // pred_region
        _
      $region40: #{yolov7_head_forward.3} parent=31 // pred_fallthru
        _
    $region32: #{yolov7_head_forward.3} parent=5 // pred_fallthru
      _
    %p514 = scmp.le.s32.totalorder 2, %s11
    // Predicated region
    $region41: #{yolov7_head_forward.3} parent=5 // pred_check
      %p515 = pneg %p514
    $region42: #{yolov7_head_forward.3} parent=5 // pred_check_branch
      %517 = sbr.rel (%p515) target = $region44
    $region43: #{yolov7_head_forward.3} parent=5 // pred_region
      %s518 = ssub.s32 %s11, 2
      // Predicated region
      $region45: #{yolov7_head_forward.3} parent=43 // pred_check
        %p519 = pneg %p124
      $region46: #{yolov7_head_forward.3} parent=43 // pred_check_branch
        %521 = sbr.rel (%p519) target = $region48
      $region47: #{yolov7_head_forward.3} parent=43 // pred_region
        %p522 = scmp.lt.s32.totalorder %s22, 1
        %s523 = scalar_select %p522, %s22, 1
        %p524 = scmp.lt.s32.totalorder %s23, 0
        %s525 = scalar_select %p524, %s23, 0
        %s526 = smul.addr %s523, 3
        %s527 = sadd.s32 %s525, %s526
        %s528 = smul.addr %s527, 8
        %s529 = scalar_lea.vmem %s3, %s528
      $region48: #{yolov7_head_forward.3} parent=43 // pred_fallthru
        _
      // Predicated region
      $region49: #{yolov7_head_forward.3} parent=43 // pred_check
        %p530 = pneg %p152
      $region50: #{yolov7_head_forward.3} parent=43 // pred_check_branch
        %532 = sbr.rel (%p530) target = $region52
      $region51: #{yolov7_head_forward.3} parent=43 // pred_region
        %p533 = scmp.lt.s32.totalorder %s22, 1
        %s534 = scalar_select %p533, %s22, 1
        %p535 = scmp.lt.s32.totalorder %s23, 0
        %s536 = scalar_select %p535, %s23, 0
        %s537 = smul.addr %s534, 3
        %s538 = sadd.s32 %s536, %s537
        %s539 = smul.addr %s538, 8
        %s540 = scalar_lea.vmem %s4, %s539
      $region52: #{yolov7_head_forward.3} parent=43 // pred_fallthru
        _
    $region44: #{yolov7_head_forward.3} parent=5 // pred_fallthru
      _
  $region6: #{yolov7_head_forward.3} parent=0 // loop_footer
    %s15 = sadd.s32 1, %s11
  $region7: #{yolov7_head_forward.3} parent=0 // loop_footer_branch
    %10 = sbr.rel target = $region3
  $region8: #{yolov7_head_forward.3} parent=0 // loop_exit
    _

</llo_original>
